<compile_context>
chip_gen: v7x
topology: tpu7x:2x2x1
jax: 0.10.0
libtpu: 0.0.40
codegen_flags: <defaults>
</compile_context>

<pallas_src>
import functools
import math

import jax
import jax.numpy as jnp
from jax.experimental import pallas as pl
from jax.experimental.pallas import tpu as pltpu

EPS = 1e-5


# ----------------------------- Fused Pallas kernel -----------------------------

def _bottleneck_kernel(stride, has_down,
                       x_ref, w1_ref, b1_ref, w2_ref, b2_ref, w3_ref, b3_ref,
                       *rest):
    """One image per grid step. x_ref: (1, Cin, H*W) f32 (channel-major / NCHW).
    Output o_ref: (1, Cout, Ho*Wo) f32 (NCHW, lane-dense)."""
    if has_down:
        wd_ref, bd_ref, o_ref, xpad_ref = rest
    else:
        o_ref, xpad_ref = rest

    s = stride
    Cin = x_ref.shape[1]
    P = w1_ref.shape[0]
    Cout = w3_ref.shape[0]
    Hp, Wp, _ = xpad_ref.shape
    H, W = Hp - 2, Wp - 2
    Ho = (H - 1) // s + 1
    Wo = (W - 1) // s + 1

    xT = x_ref[0]                                          # (Cin, H*W) f32, lane-dense
    xT16 = xT.astype(jnp.bfloat16)

    # ---- conv1 (1x1) + bn1 + relu, channel-major: y1T = w1^T @ x^T ----
    y1T = jnp.dot(w1_ref[...], xT16, preferred_element_type=jnp.float32)
    y1T = jnp.maximum(y1T + b1_ref[...], 0.0)              # (P, H*W) f32

    # ---- pad to (H+2, W+2, P) in VMEM (no HBM pad pass) ----
    y1 = jnp.transpose(y1T)                                # (H*W, P) f32
    xpad_ref[...] = jnp.zeros(xpad_ref.shape, xpad_ref.dtype)
    xpad_ref[1:H + 1, 1:W + 1, :] = y1.reshape(H, W, P)
    xp = xpad_ref[...]                                     # (Hp, Wp, P) f32

    # ---- in-VMEM im2col: one K = 9*P matmul for the 3x3 conv ----
    span_h = s * (Ho - 1) + 1
    span_w = s * (Wo - 1) + 1
    cols = []
    for dy in range(3):
        for dx in range(3):
            if s == 1:
                win = xp[dy:dy + Ho, dx:dx + Wo, :]        # (Ho, Wo, P)
            else:
                win = xp[dy:dy + span_h:s, dx:dx + span_w:s, :]
            cols.append(win.reshape(Ho * Wo, P))
    col = jnp.concatenate(cols, axis=1).astype(jnp.bfloat16)   # (Ho*Wo, 9*P)

    # ---- conv2 (3x3, stride) + bn2 + relu ----
    y2 = jnp.dot(col, w2_ref[...], preferred_element_type=jnp.float32)
    y2 = jnp.maximum(y2 + b2_ref[...], 0.0)                # (Ho*Wo, P) f32
    y2T = jnp.transpose(y2).astype(jnp.bfloat16)           # (P, Ho*Wo)

    # ---- conv3 (1x1) + bn3, channel-major (lane-dense output) ----
    y3T = jnp.dot(w3_ref[...], y2T, preferred_element_type=jnp.float32)
    y3T = y3T + b3_ref[...]                                # (Cout, Ho*Wo) f32

    # ---- residual branch (downsample or identity), all in VMEM ----
    if s == 1:
        xTs = xT                                           # (Cin, Ho*Wo)
    else:
        xTs = xT.reshape(Cin, H, W)[:, ::s, ::s].reshape(Cin, Ho * Wo)
    if has_down:
        resT = jnp.dot(wd_ref[...], xTs.astype(jnp.bfloat16),
                       preferred_element_type=jnp.float32) + bd_ref[...]
    else:
        resT = xTs                                         # requires Cin == Cout

    # ---- add + relu, store NCHW (lane dim = Ho*Wo) ----
    o_ref[0] = jnp.maximum(y3T + resT, 0.0).astype(o_ref.dtype)


# ----------------------------- Wrapper -----------------------------

def _bn_affine(bn):
    scale = bn["gamma"] / jnp.sqrt(bn["var"] + EPS)
    shift = bn["beta"] - bn["mean"] * scale
    return scale, shift


def bottleneck_forward(x_nchw, params, *, stride=1):
    """Bottleneck_cifar.forward; input/output are NCHW like PyTorch."""
    B, Cin, H, W = x_nchw.shape
    P = params["bn1"]["gamma"].shape[0]
    Cout = params["bn3"]["gamma"].shape[0]
    has_down = "down_w" in params
    s = stride
    Ho = (H - 1) // s + 1
    Wo = (W - 1) // s + 1
    if not has_down:
        assert Cin == Cout and s == 1, "identity residual requires matching shapes"

    # Fold BN scale into the (bf16) weights; keep only the shift in the epilogue.
    s1, b1 = _bn_affine(params["bn1"])
    s2, b2 = _bn_affine(params["bn2"])
    s3, b3 = _bn_affine(params["bn3"])
    w1t = (params["conv1_w"] * s1[None, :]).T.astype(jnp.bfloat16)              # (P, Cin)
    w2f = (params["conv2_w"] * s2[None, None, :]).reshape(9 * P, P).astype(jnp.bfloat16)
    w3t = (params["conv3_w"] * s3[None, :]).T.astype(jnp.bfloat16)              # (Cout, P)
    b1c = b1.reshape(P, 1).astype(jnp.float32)
    b2r = b2.reshape(1, P).astype(jnp.float32)
    b3c = b3.reshape(Cout, 1).astype(jnp.float32)

    x2 = x_nchw.reshape(B, Cin, H * W).astype(jnp.float32)   # free reshape, stays NCHW

    args = [x2, w1t, b1c, w2f, b2r, w3t, b3c]
    in_specs = [
        pl.BlockSpec((1, Cin, H * W), lambda b: (b, 0, 0)),
        pl.BlockSpec((P, Cin), lambda b: (0, 0)),
        pl.BlockSpec((P, 1), lambda b: (0, 0)),
        pl.BlockSpec((9 * P, P), lambda b: (0, 0)),
        pl.BlockSpec((1, P), lambda b: (0, 0)),
        pl.BlockSpec((Cout, P), lambda b: (0, 0)),
        pl.BlockSpec((Cout, 1), lambda b: (0, 0)),
    ]
    weight_bytes = (w1t.size + w2f.size + w3t.size) * 2 + (P + P + Cout) * 4
    flops = 2 * B * (H * W * Cin * P + Ho * Wo * 9 * P * P + Ho * Wo * P * Cout)
    if has_down:
        sd, bd = _bn_affine(params["down_bn"])
        wdt = (params["down_w"] * sd[None, :]).T.astype(jnp.bfloat16)           # (Cout, Cin)
        bdc = bd.reshape(Cout, 1).astype(jnp.float32)
        args += [wdt, bdc]
        in_specs += [pl.BlockSpec((Cout, Cin), lambda b: (0, 0)),
                     pl.BlockSpec((Cout, 1), lambda b: (0, 0))]
        weight_bytes += wdt.size * 2 + Cout * 4
        flops += 2 * B * Ho * Wo * Cin * Cout

    cost = pl.CostEstimate(
        flops=flops, transcendentals=0,
        bytes_accessed=B * Cin * H * W * 4 + B * Cout * Ho * Wo * 4 + weight_bytes)

    kernel = functools.partial(_bottleneck_kernel, s, has_down)

    out = pl.pallas_call(
        kernel,
        grid=(B,),
        in_specs=in_specs,
        out_specs=pl.BlockSpec((1, Cout, Ho * Wo), lambda b: (b, 0, 0)),
        out_shape=jax.ShapeDtypeStruct((B, Cout, Ho * Wo), jnp.float32),
        scratch_shapes=[pltpu.VMEM((H + 2, W + 2, P), jnp.float32)],
        compiler_params=pltpu.CompilerParams(dimension_semantics=("parallel",)),
        cost_estimate=cost,
    )(*args)

    return out.reshape(B, Cout, Ho, Wo)                     # already NCHW


# ----------------------------- Parameters -----------------------------

def _conv_init(key, kh, kw, cin, cout):
    # PyTorch resnet_cifar init: normal(0, sqrt(2 / (kh*kw*cout)))
    n = kh * kw * cout
    return jax.random.normal(key, (kh, kw, cin, cout), jnp.float32) * math.sqrt(2.0 / n)


def _bn_init(c):
    return {"gamma": jnp.ones((c,), jnp.float32),
            "beta": jnp.zeros((c,), jnp.float32),
            "mean": jnp.zeros((c,), jnp.float32),
            "var": jnp.ones((c,), jnp.float32)}


def make_bottleneck_params(key, inplanes, planes, stride=1):
    expansion = 4
    k1, k2, k3, k4 = jax.random.split(key, 4)
    params = {
        "conv1_w": _conv_init(k1, 1, 1, inplanes, planes).reshape(inplanes, planes),
        "bn1": _bn_init(planes),
        "conv2_w": _conv_init(k2, 3, 3, planes, planes).reshape(9, planes, planes),
        "bn2": _bn_init(planes),
        "conv3_w": _conv_init(k3, 1, 1, planes, planes * expansion).reshape(
            planes, planes * expansion),
        "bn3": _bn_init(planes * expansion),
    }
    if stride != 1 or inplanes != planes * expansion:
        params["down_w"] = _conv_init(k4, 1, 1, inplanes, planes * expansion).reshape(
            inplanes, planes * expansion)
        params["down_bn"] = _bn_init(planes * expansion)
    return params


# ----------------------------- f32 reference (for sanity) -----------------------------

def _ref_bottleneck(x, params, stride):
    hp = jax.lax.Precision.HIGHEST

    def bn(y, p):
        sc = p["gamma"] / jnp.sqrt(p["var"] + EPS)
        sh = p["beta"] - p["mean"] * sc
        return y * sc[None, :, None, None] + sh[None, :, None, None]

    def conv(x, w_hwio, s, pad):
        return jax.lax.conv_general_dilated(
            x, w_hwio, (s, s), pad,
            dimension_numbers=("NCHW", "HWIO", "NCHW"), precision=hp)

    P = params["bn1"]["gamma"].shape[0]
    w1 = params["conv1_w"].reshape(1, 1, *params["conv1_w"].shape)
    w2 = params["conv2_w"].reshape(3, 3, P, P)
    w3 = params["conv3_w"].reshape(1, 1, *params["conv3_w"].shape)
    out = jax.nn.relu(bn(conv(x, w1, 1, "VALID"), params["bn1"]))
    out = jax.nn.relu(bn(conv(out, w2, stride, ((1, 1), (1, 1))), params["bn2"]))
    out = bn(conv(out, w3, 1, "VALID"), params["bn3"])
    if "down_w" in params:
        wd = params["down_w"].reshape(1, 1, *params["down_w"].shape)
        res = bn(conv(x, wd, stride, "VALID"), params["down_bn"])
    else:
        res = x if stride == 1 else x[:, :, ::stride, ::stride]
    return jax.nn.relu(out + res)


# ----------------------------- Main -----------------------------

if __name__ == "__main__":
    key = jax.random.PRNGKey(0)
    kx, kp = jax.random.split(key)
    # CIFAR-style shapes: batch=2, inplanes=16, planes=16 (expansion=4 -> 64 out
    # channels), 16x16 spatial, stride=1. A 1x1+BN downsample is present on the residual
    # since inplanes != planes*4, exactly as the parent ResNet would construct it.
    B, inplanes, planes, H, W, stride = 2, 16, 16, 16, 16, 1
    x = jax.random.normal(kx, (B, inplanes, H, W), jnp.float32)
    params = make_bottleneck_params(kp, inplanes, planes, stride)

    fwd = jax.jit(lambda xx, pp: bottleneck_forward(xx, pp, stride=stride))
    out = fwd(x, params)
    jax.block_until_ready(out)
    assert out.shape == (B, planes * 4, H // stride, W // stride), out.shape

    # Loose check vs f32 XLA reference (kernel matmuls run in bf16 on the MXU).
    ref = _ref_bottleneck(x, params, stride)
    err = float(jnp.max(jnp.abs(out - ref)))
    assert err < 0.2, f"max abs error vs reference: {err}"

    print("KERNEL_OK")
</pallas_src>

<mosaic_0001>
module attributes {stable_mosaic.version = 11 : i64} {
  func.func @_bottleneck_kernel(%arg0: i32, %arg1: memref<1x16x256xf32, #tpu.memory_space<vmem>>, %arg2: memref<16x16xbf16, #tpu.memory_space<vmem>>, %arg3: memref<16x1xf32, #tpu.memory_space<vmem>>, %arg4: memref<144x16xbf16, #tpu.memory_space<vmem>>, %arg5: memref<1x16xf32, #tpu.memory_space<vmem>>, %arg6: memref<64x16xbf16, #tpu.memory_space<vmem>>, %arg7: memref<64x1xf32, #tpu.memory_space<vmem>>, %arg8: memref<64x16xbf16, #tpu.memory_space<vmem>>, %arg9: memref<64x1xf32, #tpu.memory_space<vmem>>, %arg10: memref<1x64x256xf32, #tpu.memory_space<vmem>>, %arg11: memref<18x18x16xf32, #tpu.memory_space<vmem>>) attributes {dimension_semantics = [#tpu.dimension_semantics<parallel>], iteration_bounds = array<i64: 2>, scalar_prefetch = 0 : i64, scratch_operands = 1 : i64, tpu.core_type = #tpu.core_type<tc>, window_params = [{transform_indices = @transform_0, window_bounds = array<i64: 1, 16, 256>}, {pipeline_mode = #tpu.pipeline_mode<synchronous>, transform_indices = @transform_1, window_bounds = array<i64: 16, 16>}, {pipeline_mode = #tpu.pipeline_mode<synchronous>, transform_indices = @transform_2, window_bounds = array<i64: 16, 1>}, {pipeline_mode = #tpu.pipeline_mode<synchronous>, transform_indices = @transform_3, window_bounds = array<i64: 144, 16>}, {pipeline_mode = #tpu.pipeline_mode<synchronous>, transform_indices = @transform_4, window_bounds = array<i64: 1, 16>}, {pipeline_mode = #tpu.pipeline_mode<synchronous>, transform_indices = @transform_5, window_bounds = array<i64: 64, 16>}, {pipeline_mode = #tpu.pipeline_mode<synchronous>, transform_indices = @transform_6, window_bounds = array<i64: 64, 1>}, {pipeline_mode = #tpu.pipeline_mode<synchronous>, transform_indices = @transform_7, window_bounds = array<i64: 64, 16>}, {pipeline_mode = #tpu.pipeline_mode<synchronous>, transform_indices = @transform_8, window_bounds = array<i64: 64, 1>}, {transform_indices = @transform_9, window_bounds = array<i64: 1, 64, 256>}]} {
    %c0 = arith.constant 0 : index
    %c0_0 = arith.constant 0 : index
    %c0_1 = arith.constant 0 : index
    %0 = vector.load %arg1[%c0, %c0_0, %c0_1] : memref<1x16x256xf32, #tpu.memory_space<vmem>>, vector<1x16x256xf32>
    %1 = vector.shape_cast %0 : vector<1x16x256xf32> to vector<16x256xf32>
    %2 = arith.truncf %1 : vector<16x256xf32> to vector<16x256xbf16>
    %c0_2 = arith.constant 0 : index
    %c0_3 = arith.constant 0 : index
    %3 = vector.load %arg2[%c0_2, %c0_3] : memref<16x16xbf16, #tpu.memory_space<vmem>>, vector<16x16xbf16>
    %cst = arith.constant dense<0.000000e+00> : vector<16x256xf32>
    %4 = tpu.matmul %3, %2, %cst {dimension_numbers = #tpu.dot_dimension_numbers<[1], [0], [0], [1], [0, 0, 1, 1], [], []>} : vector<16x16xbf16>, vector<16x256xbf16>, vector<16x256xf32> -> vector<16x256xf32>
    %c0_4 = arith.constant 0 : index
    %c0_5 = arith.constant 0 : index
    %5 = vector.load %arg3[%c0_4, %c0_5] : memref<16x1xf32, #tpu.memory_space<vmem>>, vector<16x1xf32>
    %6 = vector.broadcast %5 : vector<16x1xf32> to vector<16x256xf32>
    %7 = arith.addf %4, %6 : vector<16x256xf32>
    %cst_6 = arith.constant 0.000000e+00 : f32
    %8 = vector.broadcast %cst_6 : f32 to vector<16x256xf32>
    %9 = arith.maximumf %7, %8 : vector<16x256xf32>
    %10 = tpu.transpose %9, [1, 0] : vector<16x256xf32> -> vector<256x16xf32>
    %cst_7 = arith.constant 0.000000e+00 : f32
    %11 = vector.broadcast %cst_7 : f32 to vector<18x18x16xf32>
    %c0_8 = arith.constant 0 : index
    %c0_9 = arith.constant 0 : index
    %c0_10 = arith.constant 0 : index
    %12 = vector.load %arg11[%c0_8, %c0_9, %c0_10] : memref<18x18x16xf32, #tpu.memory_space<vmem>>, vector<18x18x16xf32>
    tpu.vector_store %arg11[%c0_8, %c0_9, %c0_10], %11 {strides = array<i32>} : memref<18x18x16xf32, #tpu.memory_space<vmem>>, vector<18x18x16xf32>,
    %13 = vector.shape_cast %10 : vector<256x16xf32> to vector<16x16x16xf32>
    %c1 = arith.constant 1 : index
    %c1_11 = arith.constant 1 : index
    %c0_12 = arith.constant 0 : index
    %14 = vector.load %arg11[%c1, %c1_11, %c0_12] : memref<18x18x16xf32, #tpu.memory_space<vmem>>, vector<16x16x16xf32>
    tpu.vector_store %arg11[%c1, %c1_11, %c0_12], %13 {strides = array<i32>} : memref<18x18x16xf32, #tpu.memory_space<vmem>>, vector<16x16x16xf32>,
    %c0_13 = arith.constant 0 : index
    %c0_14 = arith.constant 0 : index
    %c0_15 = arith.constant 0 : index
    %15 = vector.load %arg11[%c0_13, %c0_14, %c0_15] : memref<18x18x16xf32, #tpu.memory_space<vmem>>, vector<18x18x16xf32>
    %16 = vector.extract_strided_slice %15 {offsets = [0, 0, 0], sizes = [16, 16, 16], strides = [1, 1, 1]} : vector<18x18x16xf32> to vector<16x16x16xf32>
    %17 = vector.shape_cast %16 : vector<16x16x16xf32> to vector<256x16xf32>
    %18 = vector.extract_strided_slice %15 {offsets = [0, 1, 0], sizes = [16, 16, 16], strides = [1, 1, 1]} : vector<18x18x16xf32> to vector<16x16x16xf32>
    %19 = vector.shape_cast %18 : vector<16x16x16xf32> to vector<256x16xf32>
    %20 = vector.extract_strided_slice %15 {offsets = [0, 2, 0], sizes = [16, 16, 16], strides = [1, 1, 1]} : vector<18x18x16xf32> to vector<16x16x16xf32>
    %21 = vector.shape_cast %20 : vector<16x16x16xf32> to vector<256x16xf32>
    %22 = vector.extract_strided_slice %15 {offsets = [1, 0, 0], sizes = [16, 16, 16], strides = [1, 1, 1]} : vector<18x18x16xf32> to vector<16x16x16xf32>
    %23 = vector.shape_cast %22 : vector<16x16x16xf32> to vector<256x16xf32>
    %24 = vector.extract_strided_slice %15 {offsets = [1, 1, 0], sizes = [16, 16, 16], strides = [1, 1, 1]} : vector<18x18x16xf32> to vector<16x16x16xf32>
    %25 = vector.shape_cast %24 : vector<16x16x16xf32> to vector<256x16xf32>
    %26 = vector.extract_strided_slice %15 {offsets = [1, 2, 0], sizes = [16, 16, 16], strides = [1, 1, 1]} : vector<18x18x16xf32> to vector<16x16x16xf32>
    %27 = vector.shape_cast %26 : vector<16x16x16xf32> to vector<256x16xf32>
    %28 = vector.extract_strided_slice %15 {offsets = [2, 0, 0], sizes = [16, 16, 16], strides = [1, 1, 1]} : vector<18x18x16xf32> to vector<16x16x16xf32>
    %29 = vector.shape_cast %28 : vector<16x16x16xf32> to vector<256x16xf32>
    %30 = vector.extract_strided_slice %15 {offsets = [2, 1, 0], sizes = [16, 16, 16], strides = [1, 1, 1]} : vector<18x18x16xf32> to vector<16x16x16xf32>
    %31 = vector.shape_cast %30 : vector<16x16x16xf32> to vector<256x16xf32>
    %32 = vector.extract_strided_slice %15 {offsets = [2, 2, 0], sizes = [16, 16, 16], strides = [1, 1, 1]} : vector<18x18x16xf32> to vector<16x16x16xf32>
    %33 = vector.shape_cast %32 : vector<16x16x16xf32> to vector<256x16xf32>
    %34 = tpu.concatenate %17, %19, %21, %23, %25, %27, %29, %31, %33 in 1 : vector<256x16xf32>, vector<256x16xf32>, vector<256x16xf32>, vector<256x16xf32>, vector<256x16xf32>, vector<256x16xf32>, vector<256x16xf32>, vector<256x16xf32>, vector<256x16xf32> -> vector<256x144xf32>
    %35 = arith.truncf %34 : vector<256x144xf32> to vector<256x144xbf16>
    %c0_16 = arith.constant 0 : index
    %c0_17 = arith.constant 0 : index
    %36 = vector.load %arg4[%c0_16, %c0_17] : memref<144x16xbf16, #tpu.memory_space<vmem>>, vector<144x16xbf16>
    %cst_18 = arith.constant dense<0.000000e+00> : vector<256x16xf32>
    %37 = tpu.matmul %35, %36, %cst_18 {dimension_numbers = #tpu.dot_dimension_numbers<[1], [0], [0], [1], [0, 0, 1, 1], [], []>} : vector<256x144xbf16>, vector<144x16xbf16>, vector<256x16xf32> -> vector<256x16xf32>
    %c0_19 = arith.constant 0 : index
    %c0_20 = arith.constant 0 : index
    %38 = vector.load %arg5[%c0_19, %c0_20] : memref<1x16xf32, #tpu.memory_space<vmem>>, vector<1x16xf32>
    %39 = vector.broadcast %38 : vector<1x16xf32> to vector<256x16xf32>
    %40 = arith.addf %37, %39 : vector<256x16xf32>
    %cst_21 = arith.constant 0.000000e+00 : f32
    %41 = vector.broadcast %cst_21 : f32 to vector<256x16xf32>
    %42 = arith.maximumf %40, %41 : vector<256x16xf32>
    %43 = tpu.transpose %42, [1, 0] : vector<256x16xf32> -> vector<16x256xf32>
    %44 = arith.truncf %43 : vector<16x256xf32> to vector<16x256xbf16>
    %c0_22 = arith.constant 0 : index
    %c0_23 = arith.constant 0 : index
    %45 = vector.load %arg6[%c0_22, %c0_23] : memref<64x16xbf16, #tpu.memory_space<vmem>>, vector<64x16xbf16>
    %cst_24 = arith.constant dense<0.000000e+00> : vector<64x256xf32>
    %46 = tpu.matmul %45, %44, %cst_24 {dimension_numbers = #tpu.dot_dimension_numbers<[1], [0], [0], [1], [0, 0, 1, 1], [], []>} : vector<64x16xbf16>, vector<16x256xbf16>, vector<64x256xf32> -> vector<64x256xf32>
    %c0_25 = arith.constant 0 : index
    %c0_26 = arith.constant 0 : index
    %47 = vector.load %arg7[%c0_25, %c0_26] : memref<64x1xf32, #tpu.memory_space<vmem>>, vector<64x1xf32>
    %48 = vector.broadcast %47 : vector<64x1xf32> to vector<64x256xf32>
    %49 = arith.addf %46, %48 : vector<64x256xf32>
    %c0_27 = arith.constant 0 : index
    %c0_28 = arith.constant 0 : index
    %50 = vector.load %arg8[%c0_27, %c0_28] : memref<64x16xbf16, #tpu.memory_space<vmem>>, vector<64x16xbf16>
    %51 = arith.truncf %1 : vector<16x256xf32> to vector<16x256xbf16>
    %cst_29 = arith.constant dense<0.000000e+00> : vector<64x256xf32>
    %52 = tpu.matmul %50, %51, %cst_29 {dimension_numbers = #tpu.dot_dimension_numbers<[1], [0], [0], [1], [0, 0, 1, 1], [], []>} : vector<64x16xbf16>, vector<16x256xbf16>, vector<64x256xf32> -> vector<64x256xf32>
    %c0_30 = arith.constant 0 : index
    %c0_31 = arith.constant 0 : index
    %53 = vector.load %arg9[%c0_30, %c0_31] : memref<64x1xf32, #tpu.memory_space<vmem>>, vector<64x1xf32>
    %54 = vector.broadcast %53 : vector<64x1xf32> to vector<64x256xf32>
    %55 = arith.addf %52, %54 : vector<64x256xf32>
    %56 = arith.addf %49, %55 : vector<64x256xf32>
    %cst_32 = arith.constant 0.000000e+00 : f32
    %57 = vector.broadcast %cst_32 : f32 to vector<64x256xf32>
    %58 = arith.maximumf %56, %57 : vector<64x256xf32>
    %c0_33 = arith.constant 0 : index
    %c0_34 = arith.constant 0 : index
    %c0_35 = arith.constant 0 : index
    %59 = vector.load %arg10[%c0_33, %c0_34, %c0_35] : memref<1x64x256xf32, #tpu.memory_space<vmem>>, vector<1x64x256xf32>
    %60 = vector.shape_cast %59 : vector<1x64x256xf32> to vector<64x256xf32>
    %61 = vector.shape_cast %58 : vector<64x256xf32> to vector<1x64x256xf32>
    tpu.vector_store %arg10[%c0_33, %c0_34, %c0_35], %61 {strides = array<i32>} : memref<1x64x256xf32, #tpu.memory_space<vmem>>, vector<1x64x256xf32>,
    return
  }
  func.func @transform_0(%arg0: i32) -> (i32, i32, i32) {
    %c0_i32 = arith.constant 0 : i32
    %c0_i32_0 = arith.constant 0 : i32
    %c0_i32_1 = arith.constant 0 : i32
    return %arg0, %c0_i32, %c0_i32_0 : i32, i32, i32
  }
  func.func @transform_1(%arg0: i32) -> (i32, i32) {
    %c0_i32 = arith.constant 0 : i32
    %c0_i32_0 = arith.constant 0 : i32
    %c0_i32_1 = arith.constant 0 : i32
    return %c0_i32, %c0_i32_0 : i32, i32
  }
  func.func @transform_2(%arg0: i32) -> (i32, i32) {
    %c0_i32 = arith.constant 0 : i32
    %c0_i32_0 = arith.constant 0 : i32
    %c0_i32_1 = arith.constant 0 : i32
    return %c0_i32, %c0_i32_0 : i32, i32
  }
  func.func @transform_3(%arg0: i32) -> (i32, i32) {
    %c0_i32 = arith.constant 0 : i32
    %c0_i32_0 = arith.constant 0 : i32
    %c0_i32_1 = arith.constant 0 : i32
    return %c0_i32, %c0_i32_0 : i32, i32
  }
  func.func @transform_4(%arg0: i32) -> (i32, i32) {
    %c0_i32 = arith.constant 0 : i32
    %c0_i32_0 = arith.constant 0 : i32
    %c0_i32_1 = arith.constant 0 : i32
    return %c0_i32, %c0_i32_0 : i32, i32
  }
  func.func @transform_5(%arg0: i32) -> (i32, i32) {
    %c0_i32 = arith.constant 0 : i32
    %c0_i32_0 = arith.constant 0 : i32
    %c0_i32_1 = arith.constant 0 : i32
    return %c0_i32, %c0_i32_0 : i32, i32
  }
  func.func @transform_6(%arg0: i32) -> (i32, i32) {
    %c0_i32 = arith.constant 0 : i32
    %c0_i32_0 = arith.constant 0 : i32
    %c0_i32_1 = arith.constant 0 : i32
    return %c0_i32, %c0_i32_0 : i32, i32
  }
  func.func @transform_7(%arg0: i32) -> (i32, i32) {
    %c0_i32 = arith.constant 0 : i32
    %c0_i32_0 = arith.constant 0 : i32
    %c0_i32_1 = arith.constant 0 : i32
    return %c0_i32, %c0_i32_0 : i32, i32
  }
  func.func @transform_8(%arg0: i32) -> (i32, i32) {
    %c0_i32 = arith.constant 0 : i32
    %c0_i32_0 = arith.constant 0 : i32
    %c0_i32_1 = arith.constant 0 : i32
    return %c0_i32, %c0_i32_0 : i32, i32
  }
  func.func @transform_9(%arg0: i32) -> (i32, i32, i32) {
    %c0_i32 = arith.constant 0 : i32
    %c0_i32_0 = arith.constant 0 : i32
    %c0_i32_1 = arith.constant 0 : i32
    return %arg0, %c0_i32, %c0_i32_0 : i32, i32, i32
  }
}

</mosaic_0001>

<llo_original>
// kernel: _lambda_.1
$region0: #{_lambda_.1}
  #allocation0 [shape = 'u32[]', space=smem, size = 0x4, offset = 0x4, fixed_abs, tag = 'smem constant byte address 0x4 - core index']
  #allocation1 [shape = 'u32[144,128]{1,0:T(1,128)}', space=vmem, size = 0x12000, scoped, tag = 'internal scratch']
  #allocation2 [shape = 'f32[18,18,16]{2,1,0:T(8,128)}', space=vmem, size = 0x36000, scoped, tag = 'scratch operand']
  %s0 = inlined_call_operand.vmem [shape: f32[2,16,256], index: 0, kind: input, shape index: {}]
  %s1 = inlined_call_operand.vmem [shape: bf16[16,16], index: 1, kind: input, shape index: {}]
  %s2 = inlined_call_operand.vmem [shape: f32[16,1], index: 2, kind: input, shape index: {}]
  %s3 = inlined_call_operand.vmem [shape: bf16[144,16], index: 3, kind: input, shape index: {}]
  %s4 = inlined_call_operand.vmem [shape: f32[1,16], index: 4, kind: input, shape index: {}]
  %s5 = inlined_call_operand.vmem [shape: bf16[64,16], index: 5, kind: input, shape index: {}]
  %s6 = inlined_call_operand.vmem [shape: f32[64,1], index: 6, kind: input, shape index: {}]
  %s7 = inlined_call_operand.vmem [shape: bf16[64,16], index: 7, kind: input, shape index: {}]
  %s8 = inlined_call_operand.vmem [shape: f32[64,1], index: 8, kind: input, shape index: {}]
  %s9 = inlined_call_operand.vmem [shape: f32[2,64,256], index: 9, kind: output, shape index: {}]
  %s10 = sld [smem:[#allocation0]]
  $region69: #{_lambda_.1} parent=0
    _
  %s12 = ssub.s32 1, %s10
  %s13 = scalar_select 0, %s12, %s10
  loop: start=0, step=1, limit=4
  $region2: #{_lambda_.1} parent=0 // loop_pre_header
    _
  $region3: #{_lambda_.1} parent=0 // loop_header
    %s15 = sphi 0, %s19
    %p16 = scmp.ge.s32.totalorder %s15, 4
    %s25 = sphi 0, %s27
    %s28 = sphi 0, %s25
    %s29 = sphi 0, %s28
    %s45 = sphi 0, %s29
    %s49 = sphi 0, %s49
    %s51 = sphi 0, %s49
    %s52 = sphi 0, %s51
    %s66 = sphi 0, %s52
    %s70 = sphi 0, %s70
    %s72 = sphi 0, %s70
    %s73 = sphi 0, %s72
    %s87 = sphi 0, %s73
    %s91 = sphi 0, %s91
    %s93 = sphi 0, %s91
    %s94 = sphi 0, %s93
    %s108 = sphi 0, %s94
    %s112 = sphi 0, %s112
    %s114 = sphi 0, %s112
    %s115 = sphi 0, %s114
    %s129 = sphi 0, %s115
    %s133 = sphi 0, %s133
    %s135 = sphi 0, %s133
    %s136 = sphi 0, %s135
    %s150 = sphi 0, %s136
    %s154 = sphi 0, %s154
    %s156 = sphi 0, %s154
    %s157 = sphi 0, %s156
    %s171 = sphi 0, %s157
    %s175 = sphi 0, %s175
    %s177 = sphi 0, %s175
    %s178 = sphi 0, %s177
    %s192 = sphi 0, %s178
    %s196 = sphi 0, %s196
    %s198 = sphi 0, %s196
    %s199 = sphi 0, %s198
    %s213 = sphi 0, %s199
    %s219 = sphi 0, %s221
    %s222 = sphi 0, %s219
    %s223 = sphi 0, %s222
    %s239 = sphi 0, %s223
  $region4: #{_lambda_.1} parent=0 // loop_header_branch
    %18 = sbr.rel (%p16) target = $region8
  $region5: #{_lambda_.1} parent=0 // loop_body
    %s20 = ssub.s32 %s15, 1
    %s21 = ssub.s32 %s15, 2
    %s22 = sadd.s32 %s15, 1
    %s23 = ssub.s32 %s15, %s22
    %p24 = scmp.eq.s32.totalorder %s23, 0
    %s26 = sadd.s32 %s25, 1
    %s27 = scalar_select %p24, %s25, %s26
    %p30 = pneg %p24
    %p31 = scmp.eq.s32.totalorder %s15, 1
    %p32 = por %p30, %p31
    %p33 = scmp.ne.s32.totalorder %s25, %s28
    %p34 = scmp.eq.s32.totalorder %s15, 0
    %p35 = por %p33, %p34
    %p36 = scmp.ne.s32.totalorder %s25, %s28
    %p37 = scmp.eq.s32.totalorder %s20, 1
    %p38 = por %p36, %p37
    %p39 = scmp.ne.s32.totalorder %s28, %s29
    %p40 = scmp.eq.s32.totalorder %s20, 0
    %p41 = por %p39, %p40
    %p42 = scmp.ne.s32.totalorder %s28, %s29
    %p43 = scmp.eq.s32.totalorder %s21, 1
    %p44 = por %p42, %p43
    %p46 = scmp.ne.s32.totalorder %s29, %s45
    %p47 = scmp.eq.s32.totalorder %s21, 0
    %p48 = por %p46, %p47
    %s50 = sadd.s32 %s49, 1
    %p53 = scmp.eq.s32.totalorder %s15, 1
    %p54 = scmp.ne.s32.totalorder %s49, %s51
    %p55 = scmp.eq.s32.totalorder %s15, 0
    %p56 = por %p54, %p55
    %p57 = scmp.ne.s32.totalorder %s49, %s51
    %p58 = scmp.eq.s32.totalorder %s20, 1
    %p59 = por %p57, %p58
    %p60 = scmp.ne.s32.totalorder %s51, %s52
    %p61 = scmp.eq.s32.totalorder %s20, 0
    %p62 = por %p60, %p61
    %p63 = scmp.ne.s32.totalorder %s51, %s52
    %p64 = scmp.eq.s32.totalorder %s21, 1
    %p65 = por %p63, %p64
    %p67 = scmp.ne.s32.totalorder %s52, %s66
    %p68 = scmp.eq.s32.totalorder %s21, 0
    %p69 = por %p67, %p68
    %s71 = sadd.s32 %s70, 1
    %p74 = scmp.eq.s32.totalorder %s15, 1
    %p75 = scmp.ne.s32.totalorder %s70, %s72
    %p76 = scmp.eq.s32.totalorder %s15, 0
    %p77 = por %p75, %p76
    %p78 = scmp.ne.s32.totalorder %s70, %s72
    %p79 = scmp.eq.s32.totalorder %s20, 1
    %p80 = por %p78, %p79
    %p81 = scmp.ne.s32.totalorder %s72, %s73
    %p82 = scmp.eq.s32.totalorder %s20, 0
    %p83 = por %p81, %p82
    %p84 = scmp.ne.s32.totalorder %s72, %s73
    %p85 = scmp.eq.s32.totalorder %s21, 1
    %p86 = por %p84, %p85
    %p88 = scmp.ne.s32.totalorder %s73, %s87
    %p89 = scmp.eq.s32.totalorder %s21, 0
    %p90 = por %p88, %p89
    %s92 = sadd.s32 %s91, 1
    %p95 = scmp.eq.s32.totalorder %s15, 1
    %p96 = scmp.ne.s32.totalorder %s91, %s93
    %p97 = scmp.eq.s32.totalorder %s15, 0
    %p98 = por %p96, %p97
    %p99 = scmp.ne.s32.totalorder %s91, %s93
    %p100 = scmp.eq.s32.totalorder %s20, 1
    %p101 = por %p99, %p100
    %p102 = scmp.ne.s32.totalorder %s93, %s94
    %p103 = scmp.eq.s32.totalorder %s20, 0
    %p104 = por %p102, %p103
    %p105 = scmp.ne.s32.totalorder %s93, %s94
    %p106 = scmp.eq.s32.totalorder %s21, 1
    %p107 = por %p105, %p106
    %p109 = scmp.ne.s32.totalorder %s94, %s108
    %p110 = scmp.eq.s32.totalorder %s21, 0
    %p111 = por %p109, %p110
    %s113 = sadd.s32 %s112, 1
    %p116 = scmp.eq.s32.totalorder %s15, 1
    %p117 = scmp.ne.s32.totalorder %s112, %s114
    %p118 = scmp.eq.s32.totalorder %s15, 0
    %p119 = por %p117, %p118
    %p120 = scmp.ne.s32.totalorder %s112, %s114
    %p121 = scmp.eq.s32.totalorder %s20, 1
    %p122 = por %p120, %p121
    %p123 = scmp.ne.s32.totalorder %s114, %s115
    %p124 = scmp.eq.s32.totalorder %s20, 0
    %p125 = por %p123, %p124
    %p126 = scmp.ne.s32.totalorder %s114, %s115
    %p127 = scmp.eq.s32.totalorder %s21, 1
    %p128 = por %p126, %p127
    %p130 = scmp.ne.s32.totalorder %s115, %s129
    %p131 = scmp.eq.s32.totalorder %s21, 0
    %p132 = por %p130, %p131
    %s134 = sadd.s32 %s133, 1
    %p137 = scmp.eq.s32.totalorder %s15, 1
    %p138 = scmp.ne.s32.totalorder %s133, %s135
    %p139 = scmp.eq.s32.totalorder %s15, 0
    %p140 = por %p138, %p139
    %p141 = scmp.ne.s32.totalorder %s133, %s135
    %p142 = scmp.eq.s32.totalorder %s20, 1
    %p143 = por %p141, %p142
    %p144 = scmp.ne.s32.totalorder %s135, %s136
    %p145 = scmp.eq.s32.totalorder %s20, 0
    %p146 = por %p144, %p145
    %p147 = scmp.ne.s32.totalorder %s135, %s136
    %p148 = scmp.eq.s32.totalorder %s21, 1
    %p149 = por %p147, %p148
    %p151 = scmp.ne.s32.totalorder %s136, %s150
    %p152 = scmp.eq.s32.totalorder %s21, 0
    %p153 = por %p151, %p152
    %s155 = sadd.s32 %s154, 1
    %p158 = scmp.eq.s32.totalorder %s15, 1
    %p159 = scmp.ne.s32.totalorder %s154, %s156
    %p160 = scmp.eq.s32.totalorder %s15, 0
    %p161 = por %p159, %p160
    %p162 = scmp.ne.s32.totalorder %s154, %s156
    %p163 = scmp.eq.s32.totalorder %s20, 1
    %p164 = por %p162, %p163
    %p165 = scmp.ne.s32.totalorder %s156, %s157
    %p166 = scmp.eq.s32.totalorder %s20, 0
    %p167 = por %p165, %p166
    %p168 = scmp.ne.s32.totalorder %s156, %s157
    %p169 = scmp.eq.s32.totalorder %s21, 1
    %p170 = por %p168, %p169
    %p172 = scmp.ne.s32.totalorder %s157, %s171
    %p173 = scmp.eq.s32.totalorder %s21, 0
    %p174 = por %p172, %p173
    %s176 = sadd.s32 %s175, 1
    %p179 = scmp.eq.s32.totalorder %s15, 1
    %p180 = scmp.ne.s32.totalorder %s175, %s177
    %p181 = scmp.eq.s32.totalorder %s15, 0
    %p182 = por %p180, %p181
    %p183 = scmp.ne.s32.totalorder %s175, %s177
    %p184 = scmp.eq.s32.totalorder %s20, 1
    %p185 = por %p183, %p184
    %p186 = scmp.ne.s32.totalorder %s177, %s178
    %p187 = scmp.eq.s32.totalorder %s20, 0
    %p188 = por %p186, %p187
    %p189 = scmp.ne.s32.totalorder %s177, %s178
    %p190 = scmp.eq.s32.totalorder %s21, 1
    %p191 = por %p189, %p190
    %p193 = scmp.ne.s32.totalorder %s178, %s192
    %p194 = scmp.eq.s32.totalorder %s21, 0
    %p195 = por %p193, %p194
    %s197 = sadd.s32 %s196, 1
    %p200 = scmp.eq.s32.totalorder %s15, 1
    %p201 = scmp.ne.s32.totalorder %s196, %s198
    %p202 = scmp.eq.s32.totalorder %s15, 0
    %p203 = por %p201, %p202
    %p204 = scmp.ne.s32.totalorder %s196, %s198
    %p205 = scmp.eq.s32.totalorder %s20, 1
    %p206 = por %p204, %p205
    %p207 = scmp.ne.s32.totalorder %s198, %s199
    %p208 = scmp.eq.s32.totalorder %s20, 0
    %p209 = por %p207, %p208
    %p210 = scmp.ne.s32.totalorder %s198, %s199
    %p211 = scmp.eq.s32.totalorder %s21, 1
    %p212 = por %p210, %p211
    %p214 = scmp.ne.s32.totalorder %s199, %s213
    %p215 = scmp.eq.s32.totalorder %s21, 0
    %p216 = por %p214, %p215
    %s217 = ssub.s32 %s15, %s22
    %p218 = scmp.eq.s32.totalorder %s217, 0
    %s220 = sadd.s32 %s219, 1
    %s221 = scalar_select %p218, %s219, %s220
    %p224 = pneg %p218
    %p225 = scmp.eq.s32.totalorder %s15, 1
    %p226 = por %p224, %p225
    %p227 = scmp.ne.s32.totalorder %s219, %s222
    %p228 = scmp.eq.s32.totalorder %s15, 0
    %p229 = por %p227, %p228
    %p230 = scmp.ne.s32.totalorder %s219, %s222
    %p231 = scmp.eq.s32.totalorder %s20, 1
    %p232 = por %p230, %p231
    %p233 = scmp.ne.s32.totalorder %s222, %s223
    %p234 = scmp.eq.s32.totalorder %s20, 0
    %p235 = por %p233, %p234
    %p236 = scmp.ne.s32.totalorder %s222, %s223
    %p237 = scmp.eq.s32.totalorder %s21, 1
    %p238 = por %p236, %p237
    %p240 = scmp.ne.s32.totalorder %s223, %s239
    %p241 = scmp.eq.s32.totalorder %s21, 0
    %p242 = por %p240, %p241
    %p243 = scmp.le.s32.totalorder 1, %s15
    %p244 = scmp.lt.s32.totalorder %s15, 3
    %p245 = pnand %p243, %p244
    %p246 = pneg %p245
    // Predicated region
    $region9: #{_lambda_.1} parent=5 // pred_check
      _
    $region10: #{_lambda_.1} parent=5 // pred_check_branch
      %248 = sbr.rel (%p245) target = $region12
    $region11: #{_lambda_.1} parent=5 // pred_region
      %s249 = ssub.s32 %s15, 1
      // Predicated region
      $region13: #{_lambda_.1} parent=11 // pred_check
        %p250 = pneg %p62
      $region14: #{_lambda_.1} parent=11 // pred_check_branch
        %252 = sbr.rel (%p250) target = $region16
      $region15: #{_lambda_.1} parent=11 // pred_region
        _
      $region16: #{_lambda_.1} parent=11 // pred_fallthru
        _
      // Predicated region
      $region17: #{_lambda_.1} parent=11 // pred_check
        %p253 = pneg %p83
      $region18: #{_lambda_.1} parent=11 // pred_check_branch
        %255 = sbr.rel (%p253) target = $region20
      $region19: #{_lambda_.1} parent=11 // pred_region
        _
      $region20: #{_lambda_.1} parent=11 // pred_fallthru
        _
      // Predicated region
      $region21: #{_lambda_.1} parent=11 // pred_check
        %p256 = pneg %p104
      $region22: #{_lambda_.1} parent=11 // pred_check_branch
        %258 = sbr.rel (%p256) target = $region24
      $region23: #{_lambda_.1} parent=11 // pred_region
        _
      $region24: #{_lambda_.1} parent=11 // pred_fallthru
        _
      // Predicated region
      $region25: #{_lambda_.1} parent=11 // pred_check
        %p259 = pneg %p125
      $region26: #{_lambda_.1} parent=11 // pred_check_branch
        %261 = sbr.rel (%p259) target = $region28
      $region27: #{_lambda_.1} parent=11 // pred_region
        _
      $region28: #{_lambda_.1} parent=11 // pred_fallthru
        _
      // Predicated region
      $region29: #{_lambda_.1} parent=11 // pred_check
        %p262 = pneg %p146
      $region30: #{_lambda_.1} parent=11 // pred_check_branch
        %264 = sbr.rel (%p262) target = $region32
      $region31: #{_lambda_.1} parent=11 // pred_region
        _
      $region32: #{_lambda_.1} parent=11 // pred_fallthru
        _
      // Predicated region
      $region33: #{_lambda_.1} parent=11 // pred_check
        %p265 = pneg %p167
      $region34: #{_lambda_.1} parent=11 // pred_check_branch
        %267 = sbr.rel (%p265) target = $region36
      $region35: #{_lambda_.1} parent=11 // pred_region
        _
      $region36: #{_lambda_.1} parent=11 // pred_fallthru
        _
      // Predicated region
      $region37: #{_lambda_.1} parent=11 // pred_check
        %p268 = pneg %p188
      $region38: #{_lambda_.1} parent=11 // pred_check_branch
        %270 = sbr.rel (%p268) target = $region40
      $region39: #{_lambda_.1} parent=11 // pred_region
        _
      $region40: #{_lambda_.1} parent=11 // pred_fallthru
        _
      // Predicated region
      $region41: #{_lambda_.1} parent=11 // pred_check
        %p271 = pneg %p209
      $region42: #{_lambda_.1} parent=11 // pred_check_branch
        %273 = sbr.rel (%p271) target = $region44
      $region43: #{_lambda_.1} parent=11 // pred_region
        _
      $region44: #{_lambda_.1} parent=11 // pred_fallthru
        _
    $region12: #{_lambda_.1} parent=5 // pred_fallthru
      _
    %p274 = scmp.lt.s32.totalorder %s15, 2
    // Predicated region
    $region45: #{_lambda_.1} parent=5 // pred_check
      %p275 = pneg %p274
    $region46: #{_lambda_.1} parent=5 // pred_check_branch
      %277 = sbr.rel (%p275) target = $region48
    $region47: #{_lambda_.1} parent=5 // pred_region
      // Predicated region
      $region49: #{_lambda_.1} parent=47 // pred_check
        %p278 = pneg %p35
      $region50: #{_lambda_.1} parent=47 // pred_check_branch
        %280 = sbr.rel (%p278) target = $region52
      $region51: #{_lambda_.1} parent=47 // pred_region
        %p281 = scmp.lt.s32.totalorder %s15, 1
        %s282 = scalar_select %p281, %s15, 1
        %s283 = smul.addr %s282, 4
        %s284 = smul.addr %s283, 8
        %s285 = scalar_lea.vmem %s0, %s284
      $region52: #{_lambda_.1} parent=47 // pred_fallthru
        _
    $region48: #{_lambda_.1} parent=5 // pred_fallthru
      _
    %p286 = scmp.le.s32.totalorder 1, %s15
    %p287 = scmp.lt.s32.totalorder %s15, 3
    %p288 = pnand %p286, %p287
    %p289 = pneg %p288
    // Predicated region
    $region53: #{_lambda_.1} parent=5 // pred_check
      _
    $region54: #{_lambda_.1} parent=5 // pred_check_branch
      %291 = sbr.rel (%p288) target = $region56
    $region55: #{_lambda_.1} parent=5 // pred_region
      %s292 = ssub.s32 %s15, 1
      %p293 = scmp.lt.s32.totalorder %s20, 1
      %s294 = scalar_select %p293, %s20, 1
      %s295 = smul.addr %s294, 4
      %s296 = smul.addr %s295, 8
      %s297 = scalar_lea.vmem %s0, %s296
      %p298 = pneg %p41
      %p299 = pneg %p38
      %p300 = pneg %p62
      %p301 = pneg %p59
      %p302 = pneg %p83
      %p303 = pneg %p80
      %p304 = pneg %p104
      %p305 = pneg %p101
      %p306 = pneg %p125
      %p307 = pneg %p122
      %p308 = pneg %p146
      %p309 = pneg %p143
      %p310 = pneg %p167
      %p311 = pneg %p164
      %p312 = pneg %p188
      %p313 = pneg %p185
      %p314 = pneg %p209
      %p315 = pneg %p206
      %p316 = pneg %p235
      %p317 = pneg %p232
      %p318 = scmp.lt.s32.totalorder %s20, 1
      %s319 = scalar_select %p318, %s20, 1
      %s320 = smul.addr %s319, 16
      %s321 = smul.addr %s320, 8
      %s322 = scalar_lea.vmem %s9, %s321
      %p323 = scmp.lt.s32.totalorder %s20, 1
      %s324 = scalar_select %p323, %s20, 1
      %s325 = smul.addr %s324, 4
      %s326 = smul.addr %s325, 8
      %s327 = scalar_lea.vmem %s0, %s326
      %p328 = scmp.lt.s32.totalorder %s20, 1
      %s329 = scalar_select %p328, %s20, 1
      %s330 = smul.addr %s329, 16
      %s331 = smul.addr %s330, 8
      %s332 = scalar_lea.vmem %s9, %s331
      %v334 = vld [vmem:[%s327] sm:$0xff]
      %v335 = vld [vmem:[%s327 + $0x8] sm:$0xff]
      %v336 = vld [vmem:[%s327 + $0x10] sm:$0xff]
      %v337 = vld [vmem:[%s327 + $0x18] sm:$0xff]
      %v338 = vpack.c.bf16 %v336, %v334
      %v339 = vpack.c.bf16 %v337, %v335
      %v340 = vld [vmem:[%s1] sm:$0xf]
      %v341 = vld [vmem:[%s1 + $0x4] sm:$0xf]
      %v342 = vld [vmem:[%s2] sm:$0xff]
      %v343 = vld [vmem:[%s2 + $0x8] sm:$0xff]
      %345 = vset.pattern.permute.xlu0 0
      %346 = vperm.xlu0 %345, %v342
      %v347 = vpop.permute.xlu0 %346
      %350 = vset.pattern.permute.xlu0 0
      %351 = vperm.xlu0 %350, %v343
      %v352 = vpop.permute.xlu0 %351
      %v356 = vunpack.c.l.b16 %v340
      %v357 = vunpack.c.l.b16 %v341
      %v358 = vpack.c.b16 %v357, %v356
      %vm359 = vcmask 130048
      %v361 = vsel %vm359, %v358, 0
      %363 = vmatprep.subr.bf16.mxu0 %v339
      %364 = vmatpush1.bf16.msra.mxu0 %v338
      %365 = vmatprep.subr.bf16.mxu0 0
      %366 = vmatpush1.bf16.msra.mxu0 0
      %367 = vmatprep.subr.bf16.mxu0 0
      %368 = vmatpush1.bf16.msra.mxu0 0
      %369 = vmatprep.subr.bf16.mxu0 0
      %370 = vmatpush1.bf16.msra.mxu0 0
      %371 = vmatprep.subr.bf16.mxu0 0
      %372 = vmatpush1.bf16.msra.mxu0 0
      %373 = vmatprep.subr.bf16.mxu0 0
      %374 = vmatpush1.bf16.msra.mxu0 0
      %375 = vmatprep.subr.bf16.mxu0 0
      %376 = vmatpush1.bf16.msra.mxu0 0
      %377 = vmatprep.subr.bf16.mxu0 0
      %378 = vmatpush1.bf16.msra.mxu0 0
      %379 = vmatprep.subr.bf16.mxu0 0
      %380 = vmatpush1.bf16.msra.mxu0 0
      %381 = vmatprep.subr.bf16.mxu0 0
      %382 = vmatpush1.bf16.msra.mxu0 0
      %383 = vmatprep.subr.bf16.mxu0 0
      %384 = vmatpush1.bf16.msra.mxu0 0
      %385 = vmatprep.subr.bf16.mxu0 0
      %386 = vmatpush1.bf16.msra.mxu0 0
      %387 = vmatprep.subr.bf16.mxu0 0
      %388 = vmatpush1.bf16.msra.mxu0 0
      %389 = vmatprep.subr.bf16.mxu0 0
      %390 = vmatpush1.bf16.msra.mxu0 0
      %391 = vmatprep.subr.bf16.mxu0 0
      %392 = vmatpush1.bf16.msra.mxu0 0
      %393 = vmatprep.subr.bf16.mxu0 0
      %394 = vmatpush1.bf16.msra.mxu0 0
      %395 = vmatprep.mubr.bf16.mxu0 0
      %396 = vmatmul.mubr.bf16.gmra.mrb[0].mxu0 %v361
      %v397 = vpop.f32.mrb[0].mxu0
      %v398 = vadd.f32 %v347, %v397
      %v399 = vpop.f32.mrb[0].mxu0
      %v400 = vadd.f32 %v347, %v399
      %v401 = vpop.f32.mrb[0].mxu0
      %v402 = vadd.f32 %v352, %v401
      %v403 = vpop.f32.mrb[0].mxu0
      %v404 = vadd.f32 %v352, %v403
      %405 = vdwg.mxu0
      %v406 = vmax.f32 %v398, 0.0
      %v407 = vmax.f32 %v400, 0.0
      %v408 = vmax.f32 %v402, 0.0
      %v409 = vmax.f32 %v404, 0.0
      %410 = vxpose.xlu0.b32.start [1/16] %v406, 128
      %411 = vxpose.xlu0.b32.cont [2/16] %v408, 128
      %412 = vxpose.xlu0.b32.cont [3/16] 0.0, 128
      %413 = vxpose.xlu0.b32.cont [4/16] 0.0, 128
      %414 = vxpose.xlu0.b32.cont [5/16] 0.0, 128
      %415 = vxpose.xlu0.b32.cont [6/16] 0.0, 128
      %416 = vxpose.xlu0.b32.cont [7/16] 0.0, 128
      %417 = vxpose.xlu0.b32.cont [8/16] 0.0, 128
      %418 = vxpose.xlu0.b32.cont [9/16] 0.0, 128
      %419 = vxpose.xlu0.b32.cont [10/16] 0.0, 128
      %420 = vxpose.xlu0.b32.cont [11/16] 0.0, 128
      %421 = vxpose.xlu0.b32.cont [12/16] 0.0, 128
      %422 = vxpose.xlu0.b32.cont [13/16] 0.0, 128
      %423 = vxpose.xlu0.b32.cont [14/16] 0.0, 128
      %424 = vxpose.xlu0.b32.cont [15/16] 0.0, 128
      %425 = vxpose.xlu0.b32.end [16/16] 0.0, 128
      %v426 = vpop.trf.xlu0
      %v427 = vpop.trf.xlu0
      %v428 = vpop.trf.xlu0
      %v429 = vpop.trf.xlu0
      %v430 = vpop.trf.xlu0
      %v431 = vpop.trf.xlu0
      %v432 = vpop.trf.xlu0
      %v433 = vpop.trf.xlu0
      %v434 = vpop.trf.xlu0
      %v435 = vpop.trf.xlu0
      %v436 = vpop.trf.xlu0
      %v437 = vpop.trf.xlu0
      %v438 = vpop.trf.xlu0
      %v439 = vpop.trf.xlu0
      %v440 = vpop.trf.xlu0
      %v441 = vpop.trf.xlu0
      %442 = vxpose.xlu0.b32.start [1/16] %v407, 128
      %443 = vxpose.xlu0.b32.cont [2/16] %v409, 128
      %444 = vxpose.xlu0.b32.cont [3/16] 0.0, 128
      %445 = vxpose.xlu0.b32.cont [4/16] 0.0, 128
      %446 = vxpose.xlu0.b32.cont [5/16] 0.0, 128
      %447 = vxpose.xlu0.b32.cont [6/16] 0.0, 128
      %448 = vxpose.xlu0.b32.cont [7/16] 0.0, 128
      %449 = vxpose.xlu0.b32.cont [8/16] 0.0, 128
      %450 = vxpose.xlu0.b32.cont [9/16] 0.0, 128
      %451 = vxpose.xlu0.b32.cont [10/16] 0.0, 128
      %452 = vxpose.xlu0.b32.cont [11/16] 0.0, 128
      %453 = vxpose.xlu0.b32.cont [12/16] 0.0, 128
      %454 = vxpose.xlu0.b32.cont [13/16] 0.0, 128
      %455 = vxpose.xlu0.b32.cont [14/16] 0.0, 128
      %456 = vxpose.xlu0.b32.cont [15/16] 0.0, 128
      %457 = vxpose.xlu0.b32.end [16/16] 0.0, 128
      %v458 = vpop.trf.xlu0
      %v459 = vpop.trf.xlu0
      %v460 = vpop.trf.xlu0
      %v461 = vpop.trf.xlu0
      %v462 = vpop.trf.xlu0
      %v463 = vpop.trf.xlu0
      %v464 = vpop.trf.xlu0
      %v465 = vpop.trf.xlu0
      %v466 = vpop.trf.xlu0
      %v467 = vpop.trf.xlu0
      %v468 = vpop.trf.xlu0
      %v469 = vpop.trf.xlu0
      %v470 = vpop.trf.xlu0
      %v471 = vpop.trf.xlu0
      %v472 = vpop.trf.xlu0
      %v473 = vpop.trf.xlu0
      %474 = vst.msk [vmem:[#allocation2] sm:$0xff] %vm359, 0.0
      %475 = vst.msk [vmem:[#allocation2 + $0x8] sm:$0xff] %vm359, 0.0
      %vm476 = vcmask 123904
      %477 = vst.msk [vmem:[#allocation2 + $0x10] sm:$0x3] %vm476, 0.0
      %478 = vst.msk [vmem:[#allocation2 + $0x18] sm:$0xff] %vm359, 0.0
      %479 = vst.msk [vmem:[#allocation2 + $0x20] sm:$0xff] %vm359, 0.0
      %480 = vst.msk [vmem:[#allocation2 + $0x28] sm:$0x3] %vm476, 0.0
      %481 = vst.msk [vmem:[#allocation2 + $0x30] sm:$0xff] %vm359, 0.0
      %482 = vst.msk [vmem:[#allocation2 + $0x38] sm:$0xff] %vm359, 0.0
      %483 = vst.msk [vmem:[#allocation2 + $0x40] sm:$0x3] %vm476, 0.0
      %484 = vst.msk [vmem:[#allocation2 + $0x48] sm:$0xff] %vm359, 0.0
      %485 = vst.msk [vmem:[#allocation2 + $0x50] sm:$0xff] %vm359, 0.0
      %486 = vst.msk [vmem:[#allocation2 + $0x58] sm:$0x3] %vm476, 0.0
      %487 = vst.msk [vmem:[#allocation2 + $0x60] sm:$0xff] %vm359, 0.0
      %488 = vst.msk [vmem:[#allocation2 + $0x68] sm:$0xff] %vm359, 0.0
      %489 = vst.msk [vmem:[#allocation2 + $0x70] sm:$0x3] %vm476, 0.0
      %490 = vst.msk [vmem:[#allocation2 + $0x78] sm:$0xff] %vm359, 0.0
      %491 = vst.msk [vmem:[#allocation2 + $0x80] sm:$0xff] %vm359, 0.0
      %492 = vst.msk [vmem:[#allocation2 + $0x88] sm:$0x3] %vm476, 0.0
      %493 = vst.msk [vmem:[#allocation2 + $0x90] sm:$0xff] %vm359, 0.0
      %494 = vst.msk [vmem:[#allocation2 + $0x98] sm:$0xff] %vm359, 0.0
      %495 = vst.msk [vmem:[#allocation2 + $0xa0] sm:$0x3] %vm476, 0.0
      %496 = vst.msk [vmem:[#allocation2 + $0xa8] sm:$0xff] %vm359, 0.0
      %497 = vst.msk [vmem:[#allocation2 + $0xb0] sm:$0xff] %vm359, 0.0
      %498 = vst.msk [vmem:[#allocation2 + $0xb8] sm:$0x3] %vm476, 0.0
      %499 = vst.msk [vmem:[#allocation2 + $0xc0] sm:$0xff] %vm359, 0.0
      %500 = vst.msk [vmem:[#allocation2 + $0xc8] sm:$0xff] %vm359, 0.0
      %501 = vst.msk [vmem:[#allocation2 + $0xd0] sm:$0x3] %vm476, 0.0
      %502 = vst.msk [vmem:[#allocation2 + $0xd8] sm:$0xff] %vm359, 0.0
      %503 = vst.msk [vmem:[#allocation2 + $0xe0] sm:$0xff] %vm359, 0.0
      %504 = vst.msk [vmem:[#allocation2 + $0xe8] sm:$0x3] %vm476, 0.0
      %505 = vst.msk [vmem:[#allocation2 + $0xf0] sm:$0xff] %vm359, 0.0
      %506 = vst.msk [vmem:[#allocation2 + $0xf8] sm:$0xff] %vm359, 0.0
      %507 = vst.msk [vmem:[#allocation2 + $0x100] sm:$0x3] %vm476, 0.0
      %508 = vst.msk [vmem:[#allocation2 + $0x108] sm:$0xff] %vm359, 0.0
      %509 = vst.msk [vmem:[#allocation2 + $0x110] sm:$0xff] %vm359, 0.0
      %510 = vst.msk [vmem:[#allocation2 + $0x118] sm:$0x3] %vm476, 0.0
      %511 = vst.msk [vmem:[#allocation2 + $0x120] sm:$0xff] %vm359, 0.0
      %512 = vst.msk [vmem:[#allocation2 + $0x128] sm:$0xff] %vm359, 0.0
      %513 = vst.msk [vmem:[#allocation2 + $0x130] sm:$0x3] %vm476, 0.0
      %514 = vst.msk [vmem:[#allocation2 + $0x138] sm:$0xff] %vm359, 0.0
      %515 = vst.msk [vmem:[#allocation2 + $0x140] sm:$0xff] %vm359, 0.0
      %516 = vst.msk [vmem:[#allocation2 + $0x148] sm:$0x3] %vm476, 0.0
      %517 = vst.msk [vmem:[#allocation2 + $0x150] sm:$0xff] %vm359, 0.0
      %518 = vst.msk [vmem:[#allocation2 + $0x158] sm:$0xff] %vm359, 0.0
      %519 = vst.msk [vmem:[#allocation2 + $0x160] sm:$0x3] %vm476, 0.0
      %520 = vst.msk [vmem:[#allocation2 + $0x168] sm:$0xff] %vm359, 0.0
      %521 = vst.msk [vmem:[#allocation2 + $0x170] sm:$0xff] %vm359, 0.0
      %522 = vst.msk [vmem:[#allocation2 + $0x178] sm:$0x3] %vm476, 0.0
      %523 = vst.msk [vmem:[#allocation2 + $0x180] sm:$0xff] %vm359, 0.0
      %524 = vst.msk [vmem:[#allocation2 + $0x188] sm:$0xff] %vm359, 0.0
      %525 = vst.msk [vmem:[#allocation2 + $0x190] sm:$0x3] %vm476, 0.0
      %526 = vst.msk [vmem:[#allocation2 + $0x198] sm:$0xff] %vm359, 0.0
      %527 = vst.msk [vmem:[#allocation2 + $0x1a0] sm:$0xff] %vm359, 0.0
      %528 = vst.msk [vmem:[#allocation2 + $0x1a8] sm:$0x3] %vm476, 0.0
      %s529 = scalar_lea.vmem [#allocation2], 24
      %530 = vst.msk [vmem:[%s529 + $0x1] sm:$0xff] %vm359, %v426
      %531 = vst.msk [vmem:[%s529 + $0x9] sm:$0xff] %vm359, %v427
      %532 = vst.msk [vmem:[%s529 + $0x19] sm:$0xff] %vm359, %v428
      %533 = vst.msk [vmem:[%s529 + $0x21] sm:$0xff] %vm359, %v429
      %534 = vst.msk [vmem:[%s529 + $0x31] sm:$0xff] %vm359, %v430
      %535 = vst.msk [vmem:[%s529 + $0x39] sm:$0xff] %vm359, %v431
      %536 = vst.msk [vmem:[%s529 + $0x49] sm:$0xff] %vm359, %v432
      %537 = vst.msk [vmem:[%s529 + $0x51] sm:$0xff] %vm359, %v433
      %538 = vst.msk [vmem:[%s529 + $0x61] sm:$0xff] %vm359, %v434
      %539 = vst.msk [vmem:[%s529 + $0x69] sm:$0xff] %vm359, %v435
      %540 = vst.msk [vmem:[%s529 + $0x79] sm:$0xff] %vm359, %v436
      %541 = vst.msk [vmem:[%s529 + $0x81] sm:$0xff] %vm359, %v437
      %542 = vst.msk [vmem:[%s529 + $0x91] sm:$0xff] %vm359, %v438
      %543 = vst.msk [vmem:[%s529 + $0x99] sm:$0xff] %vm359, %v439
      %544 = vst.msk [vmem:[%s529 + $0xa9] sm:$0xff] %vm359, %v440
      %545 = vst.msk [vmem:[%s529 + $0xb1] sm:$0xff] %vm359, %v441
      %546 = vst.msk [vmem:[%s529 + $0xc1] sm:$0xff] %vm359, %v458
      %547 = vst.msk [vmem:[%s529 + $0xc9] sm:$0xff] %vm359, %v459
      %548 = vst.msk [vmem:[%s529 + $0xd9] sm:$0xff] %vm359, %v460
      %549 = vst.msk [vmem:[%s529 + $0xe1] sm:$0xff] %vm359, %v461
      %550 = vst.msk [vmem:[%s529 + $0xf1] sm:$0xff] %vm359, %v462
      %551 = vst.msk [vmem:[%s529 + $0xf9] sm:$0xff] %vm359, %v463
      %552 = vst.msk [vmem:[%s529 + $0x109] sm:$0xff] %vm359, %v464
      %553 = vst.msk [vmem:[%s529 + $0x111] sm:$0xff] %vm359, %v465
      %554 = vst.msk [vmem:[%s529 + $0x121] sm:$0xff] %vm359, %v466
      %555 = vst.msk [vmem:[%s529 + $0x129] sm:$0xff] %vm359, %v467
      %556 = vst.msk [vmem:[%s529 + $0x139] sm:$0xff] %vm359, %v468
      %557 = vst.msk [vmem:[%s529 + $0x141] sm:$0xff] %vm359, %v469
      %558 = vst.msk [vmem:[%s529 + $0x151] sm:$0xff] %vm359, %v470
      %559 = vst.msk [vmem:[%s529 + $0x159] sm:$0xff] %vm359, %v471
      %560 = vst.msk [vmem:[%s529 + $0x169] sm:$0xff] %vm359, %v472
      %561 = vst.msk [vmem:[%s529 + $0x171] sm:$0xff] %vm359, %v473
      %v562 = vld [vmem:[#allocation2] sm:$0xff]
      %v563 = vld [vmem:[#allocation2 + $0x8] sm:$0xff]
      %v564 = vld [vmem:[#allocation2 + $0x10] sm:$0x3]
      %v565 = vld [vmem:[#allocation2 + $0x18] sm:$0xff]
      %v566 = vld [vmem:[#allocation2 + $0x20] sm:$0xff]
      %v567 = vld [vmem:[#allocation2 + $0x28] sm:$0x3]
      %v568 = vld [vmem:[#allocation2 + $0x30] sm:$0xff]
      %v569 = vld [vmem:[#allocation2 + $0x38] sm:$0xff]
      %v570 = vld [vmem:[#allocation2 + $0x40] sm:$0x3]
      %v571 = vld [vmem:[#allocation2 + $0x48] sm:$0xff]
      %v572 = vld [vmem:[#allocation2 + $0x50] sm:$0xff]
      %v573 = vld [vmem:[#allocation2 + $0x58] sm:$0x3]
      %v574 = vld [vmem:[#allocation2 + $0x60] sm:$0xff]
      %v575 = vld [vmem:[#allocation2 + $0x68] sm:$0xff]
      %v576 = vld [vmem:[#allocation2 + $0x70] sm:$0x3]
      %v577 = vld [vmem:[#allocation2 + $0x78] sm:$0xff]
      %v578 = vld [vmem:[#allocation2 + $0x80] sm:$0xff]
      %v579 = vld [vmem:[#allocation2 + $0x88] sm:$0x3]
      %v580 = vld [vmem:[#allocation2 + $0x90] sm:$0xff]
      %v581 = vld [vmem:[#allocation2 + $0x98] sm:$0xff]
      %v582 = vld [vmem:[#allocation2 + $0xa0] sm:$0x3]
      %v583 = vld [vmem:[#allocation2 + $0xa8] sm:$0xff]
      %v584 = vld [vmem:[#allocation2 + $0xb0] sm:$0xff]
      %v585 = vld [vmem:[#allocation2 + $0xb8] sm:$0x3]
      %v586 = vld [vmem:[#allocation2 + $0xc0] sm:$0xff]
      %v587 = vld [vmem:[#allocation2 + $0xc8] sm:$0xff]
      %v588 = vld [vmem:[#allocation2 + $0xd0] sm:$0x3]
      %v589 = vld [vmem:[#allocation2 + $0xd8] sm:$0xff]
      %v590 = vld [vmem:[#allocation2 + $0xe0] sm:$0xff]
      %v591 = vld [vmem:[#allocation2 + $0xe8] sm:$0x3]
      %v592 = vld [vmem:[#allocation2 + $0xf0] sm:$0xff]
      %v593 = vld [vmem:[#allocation2 + $0xf8] sm:$0xff]
      %v594 = vld [vmem:[#allocation2 + $0x100] sm:$0x3]
      %v595 = vld [vmem:[#allocation2 + $0x108] sm:$0xff]
      %v596 = vld [vmem:[#allocation2 + $0x110] sm:$0xff]
      %v597 = vld [vmem:[#allocation2 + $0x118] sm:$0x3]
      %v598 = vld [vmem:[#allocation2 + $0x120] sm:$0xff]
      %v599 = vld [vmem:[#allocation2 + $0x128] sm:$0xff]
      %v600 = vld [vmem:[#allocation2 + $0x130] sm:$0x3]
      %v601 = vld [vmem:[#allocation2 + $0x138] sm:$0xff]
      %v602 = vld [vmem:[#allocation2 + $0x140] sm:$0xff]
      %v603 = vld [vmem:[#allocation2 + $0x148] sm:$0x3]
      %v604 = vld [vmem:[#allocation2 + $0x150] sm:$0xff]
      %v605 = vld [vmem:[#allocation2 + $0x158] sm:$0xff]
      %v606 = vld [vmem:[#allocation2 + $0x160] sm:$0x3]
      %v607 = vld [vmem:[#allocation2 + $0x168] sm:$0xff]
      %v608 = vld [vmem:[#allocation2 + $0x170] sm:$0xff]
      %v609 = vld [vmem:[#allocation2 + $0x178] sm:$0x3]
      %v610 = vld [vmem:[#allocation2 + $0x180] sm:$0xff]
      %v611 = vld [vmem:[#allocation2 + $0x188] sm:$0xff]
      %v612 = vld [vmem:[#allocation2 + $0x190] sm:$0x3]
      %v613 = vld [vmem:[#allocation2 + $0x198] sm:$0xff]
      %v614 = vld [vmem:[#allocation2 + $0x1a0] sm:$0xff]
      %v615 = vld [vmem:[#allocation2 + $0x1a8] sm:$0x3]
      %vm664 = vcmask 1046528
      %v665 = vrot.slane %v562, 1
      %v666 = vrot.slane %v563, 1
      %v667 = vsel %vm664, %v665, %v666
      %v668 = vrot.slane %v564, 1
      %v669 = vsel %vm664, %v666, %v668
      %v670 = vrot.slane %v565, 1
      %v671 = vrot.slane %v566, 1
      %v672 = vsel %vm664, %v670, %v671
      %v673 = vrot.slane %v567, 1
      %v674 = vsel %vm664, %v671, %v673
      %v675 = vrot.slane %v568, 1
      %v676 = vrot.slane %v569, 1
      %v677 = vsel %vm664, %v675, %v676
      %v678 = vrot.slane %v570, 1
      %v679 = vsel %vm664, %v676, %v678
      %v680 = vrot.slane %v571, 1
      %v681 = vrot.slane %v572, 1
      %v682 = vsel %vm664, %v680, %v681
      %v683 = vrot.slane %v573, 1
      %v684 = vsel %vm664, %v681, %v683
      %v685 = vrot.slane %v574, 1
      %v686 = vrot.slane %v575, 1
      %v687 = vsel %vm664, %v685, %v686
      %v688 = vrot.slane %v576, 1
      %v689 = vsel %vm664, %v686, %v688
      %v690 = vrot.slane %v577, 1
      %v691 = vrot.slane %v578, 1
      %v692 = vsel %vm664, %v690, %v691
      %v693 = vrot.slane %v579, 1
      %v694 = vsel %vm664, %v691, %v693
      %v695 = vrot.slane %v580, 1
      %v696 = vrot.slane %v581, 1
      %v697 = vsel %vm664, %v695, %v696
      %v698 = vrot.slane %v582, 1
      %v699 = vsel %vm664, %v696, %v698
      %v700 = vrot.slane %v583, 1
      %v701 = vrot.slane %v584, 1
      %v702 = vsel %vm664, %v700, %v701
      %v703 = vrot.slane %v585, 1
      %v704 = vsel %vm664, %v701, %v703
      %v705 = vrot.slane %v586, 1
      %v706 = vrot.slane %v587, 1
      %v707 = vsel %vm664, %v705, %v706
      %v708 = vrot.slane %v588, 1
      %v709 = vsel %vm664, %v706, %v708
      %v710 = vrot.slane %v589, 1
      %v711 = vrot.slane %v590, 1
      %v712 = vsel %vm664, %v710, %v711
      %v713 = vrot.slane %v591, 1
      %v714 = vsel %vm664, %v711, %v713
      %v715 = vrot.slane %v592, 1
      %v716 = vrot.slane %v593, 1
      %v717 = vsel %vm664, %v715, %v716
      %v718 = vrot.slane %v594, 1
      %v719 = vsel %vm664, %v716, %v718
      %v720 = vrot.slane %v595, 1
      %v721 = vrot.slane %v596, 1
      %v722 = vsel %vm664, %v720, %v721
      %v723 = vrot.slane %v597, 1
      %v724 = vsel %vm664, %v721, %v723
      %v725 = vrot.slane %v598, 1
      %v726 = vrot.slane %v599, 1
      %v727 = vsel %vm664, %v725, %v726
      %v728 = vrot.slane %v600, 1
      %v729 = vsel %vm664, %v726, %v728
      %v730 = vrot.slane %v601, 1
      %v731 = vrot.slane %v602, 1
      %v732 = vsel %vm664, %v730, %v731
      %v733 = vrot.slane %v603, 1
      %v734 = vsel %vm664, %v731, %v733
      %v735 = vrot.slane %v604, 1
      %v736 = vrot.slane %v605, 1
      %v737 = vsel %vm664, %v735, %v736
      %v738 = vrot.slane %v606, 1
      %v739 = vsel %vm664, %v736, %v738
      %v740 = vrot.slane %v607, 1
      %v741 = vrot.slane %v608, 1
      %v742 = vsel %vm664, %v740, %v741
      %v743 = vrot.slane %v609, 1
      %v744 = vsel %vm664, %v741, %v743
      %vm745 = vcmask 1045504
      %v746 = vrot.slane %v562, 2
      %v747 = vrot.slane %v563, 2
      %v748 = vsel %vm745, %v746, %v747
      %v749 = vrot.slane %v564, 2
      %v750 = vsel %vm745, %v747, %v749
      %v751 = vrot.slane %v565, 2
      %v752 = vrot.slane %v566, 2
      %v753 = vsel %vm745, %v751, %v752
      %v754 = vrot.slane %v567, 2
      %v755 = vsel %vm745, %v752, %v754
      %v756 = vrot.slane %v568, 2
      %v757 = vrot.slane %v569, 2
      %v758 = vsel %vm745, %v756, %v757
      %v759 = vrot.slane %v570, 2
      %v760 = vsel %vm745, %v757, %v759
      %v761 = vrot.slane %v571, 2
      %v762 = vrot.slane %v572, 2
      %v763 = vsel %vm745, %v761, %v762
      %v764 = vrot.slane %v573, 2
      %v765 = vsel %vm745, %v762, %v764
      %v766 = vrot.slane %v574, 2
      %v767 = vrot.slane %v575, 2
      %v768 = vsel %vm745, %v766, %v767
      %v769 = vrot.slane %v576, 2
      %v770 = vsel %vm745, %v767, %v769
      %v771 = vrot.slane %v577, 2
      %v772 = vrot.slane %v578, 2
      %v773 = vsel %vm745, %v771, %v772
      %v774 = vrot.slane %v579, 2
      %v775 = vsel %vm745, %v772, %v774
      %v776 = vrot.slane %v580, 2
      %v777 = vrot.slane %v581, 2
      %v778 = vsel %vm745, %v776, %v777
      %v779 = vrot.slane %v582, 2
      %v780 = vsel %vm745, %v777, %v779
      %v781 = vrot.slane %v583, 2
      %v782 = vrot.slane %v584, 2
      %v783 = vsel %vm745, %v781, %v782
      %v784 = vrot.slane %v585, 2
      %v785 = vsel %vm745, %v782, %v784
      %v786 = vrot.slane %v586, 2
      %v787 = vrot.slane %v587, 2
      %v788 = vsel %vm745, %v786, %v787
      %v789 = vrot.slane %v588, 2
      %v790 = vsel %vm745, %v787, %v789
      %v791 = vrot.slane %v589, 2
      %v792 = vrot.slane %v590, 2
      %v793 = vsel %vm745, %v791, %v792
      %v794 = vrot.slane %v591, 2
      %v795 = vsel %vm745, %v792, %v794
      %v796 = vrot.slane %v592, 2
      %v797 = vrot.slane %v593, 2
      %v798 = vsel %vm745, %v796, %v797
      %v799 = vrot.slane %v594, 2
      %v800 = vsel %vm745, %v797, %v799
      %v801 = vrot.slane %v595, 2
      %v802 = vrot.slane %v596, 2
      %v803 = vsel %vm745, %v801, %v802
      %v804 = vrot.slane %v597, 2
      %v805 = vsel %vm745, %v802, %v804
      %v806 = vrot.slane %v598, 2
      %v807 = vrot.slane %v599, 2
      %v808 = vsel %vm745, %v806, %v807
      %v809 = vrot.slane %v600, 2
      %v810 = vsel %vm745, %v807, %v809
      %v811 = vrot.slane %v601, 2
      %v812 = vrot.slane %v602, 2
      %v813 = vsel %vm745, %v811, %v812
      %v814 = vrot.slane %v603, 2
      %v815 = vsel %vm745, %v812, %v814
      %v816 = vrot.slane %v604, 2
      %v817 = vrot.slane %v605, 2
      %v818 = vsel %vm745, %v816, %v817
      %v819 = vrot.slane %v606, 2
      %v820 = vsel %vm745, %v817, %v819
      %v821 = vrot.slane %v607, 2
      %v822 = vrot.slane %v608, 2
      %v823 = vsel %vm745, %v821, %v822
      %v824 = vrot.slane %v609, 2
      %v825 = vsel %vm745, %v822, %v824
      %v829 = vrot.slane %v610, 1
      %v830 = vrot.slane %v611, 1
      %v831 = vsel %vm664, %v829, %v830
      %v832 = vrot.slane %v612, 1
      %v833 = vsel %vm664, %v830, %v832
      %v834 = vrot.slane %v610, 2
      %v835 = vrot.slane %v611, 2
      %v836 = vsel %vm745, %v834, %v835
      %v837 = vrot.slane %v612, 2
      %v838 = vsel %vm745, %v835, %v837
      %v842 = vrot.slane %v613, 1
      %v843 = vrot.slane %v614, 1
      %v844 = vsel %vm664, %v842, %v843
      %v845 = vrot.slane %v615, 1
      %v846 = vsel %vm664, %v843, %v845
      %v847 = vrot.slane %v613, 2
      %v848 = vrot.slane %v614, 2
      %v849 = vsel %vm745, %v847, %v848
      %v850 = vrot.slane %v615, 2
      %v851 = vsel %vm745, %v848, %v850
      %884 = vrot.lane.b32.xlu0 %v667, 16
      %v885 = vpop.permute.xlu0 %884
      %886 = vrot.lane.b32.xlu0 %v669, 16
      %v887 = vpop.permute.xlu0 %886
      %888 = vrot.lane.b32.xlu0 %v672, 16
      %v889 = vpop.permute.xlu0 %888
      %890 = vrot.lane.b32.xlu0 %v674, 16
      %v891 = vpop.permute.xlu0 %890
      %892 = vrot.lane.b32.xlu0 %v677, 16
      %v893 = vpop.permute.xlu0 %892
      %894 = vrot.lane.b32.xlu0 %v679, 16
      %v895 = vpop.permute.xlu0 %894
      %896 = vrot.lane.b32.xlu0 %v682, 16
      %v897 = vpop.permute.xlu0 %896
      %898 = vrot.lane.b32.xlu0 %v684, 16
      %v899 = vpop.permute.xlu0 %898
      %900 = vrot.lane.b32.xlu0 %v687, 16
      %v901 = vpop.permute.xlu0 %900
      %902 = vrot.lane.b32.xlu0 %v689, 16
      %v903 = vpop.permute.xlu0 %902
      %904 = vrot.lane.b32.xlu0 %v692, 16
      %v905 = vpop.permute.xlu0 %904
      %906 = vrot.lane.b32.xlu0 %v694, 16
      %v907 = vpop.permute.xlu0 %906
      %908 = vrot.lane.b32.xlu0 %v697, 16
      %v909 = vpop.permute.xlu0 %908
      %910 = vrot.lane.b32.xlu0 %v699, 16
      %v911 = vpop.permute.xlu0 %910
      %912 = vrot.lane.b32.xlu0 %v702, 16
      %v913 = vpop.permute.xlu0 %912
      %914 = vrot.lane.b32.xlu0 %v704, 16
      %v915 = vpop.permute.xlu0 %914
      %916 = vrot.lane.b32.xlu0 %v707, 16
      %v917 = vpop.permute.xlu0 %916
      %918 = vrot.lane.b32.xlu0 %v709, 16
      %v919 = vpop.permute.xlu0 %918
      %920 = vrot.lane.b32.xlu0 %v712, 16
      %v921 = vpop.permute.xlu0 %920
      %922 = vrot.lane.b32.xlu0 %v714, 16
      %v923 = vpop.permute.xlu0 %922
      %924 = vrot.lane.b32.xlu0 %v717, 16
      %v925 = vpop.permute.xlu0 %924
      %926 = vrot.lane.b32.xlu0 %v719, 16
      %v927 = vpop.permute.xlu0 %926
      %928 = vrot.lane.b32.xlu0 %v722, 16
      %v929 = vpop.permute.xlu0 %928
      %930 = vrot.lane.b32.xlu0 %v724, 16
      %v931 = vpop.permute.xlu0 %930
      %932 = vrot.lane.b32.xlu0 %v727, 16
      %v933 = vpop.permute.xlu0 %932
      %934 = vrot.lane.b32.xlu0 %v729, 16
      %v935 = vpop.permute.xlu0 %934
      %936 = vrot.lane.b32.xlu0 %v732, 16
      %v937 = vpop.permute.xlu0 %936
      %938 = vrot.lane.b32.xlu0 %v734, 16
      %v939 = vpop.permute.xlu0 %938
      %940 = vrot.lane.b32.xlu0 %v737, 16
      %v941 = vpop.permute.xlu0 %940
      %942 = vrot.lane.b32.xlu0 %v739, 16
      %v943 = vpop.permute.xlu0 %942
      %944 = vrot.lane.b32.xlu0 %v742, 16
      %v945 = vpop.permute.xlu0 %944
      %946 = vrot.lane.b32.xlu0 %v744, 16
      %v947 = vpop.permute.xlu0 %946
      %980 = vrot.lane.b32.xlu0 %v748, 32
      %v981 = vpop.permute.xlu0 %980
      %982 = vrot.lane.b32.xlu0 %v750, 32
      %v983 = vpop.permute.xlu0 %982
      %984 = vrot.lane.b32.xlu0 %v753, 32
      %v985 = vpop.permute.xlu0 %984
      %986 = vrot.lane.b32.xlu0 %v755, 32
      %v987 = vpop.permute.xlu0 %986
      %988 = vrot.lane.b32.xlu0 %v758, 32
      %v989 = vpop.permute.xlu0 %988
      %990 = vrot.lane.b32.xlu0 %v760, 32
      %v991 = vpop.permute.xlu0 %990
      %992 = vrot.lane.b32.xlu0 %v763, 32
      %v993 = vpop.permute.xlu0 %992
      %994 = vrot.lane.b32.xlu0 %v765, 32
      %v995 = vpop.permute.xlu0 %994
      %996 = vrot.lane.b32.xlu0 %v768, 32
      %v997 = vpop.permute.xlu0 %996
      %998 = vrot.lane.b32.xlu0 %v770, 32
      %v999 = vpop.permute.xlu0 %998
      %1000 = vrot.lane.b32.xlu0 %v773, 32
      %v1001 = vpop.permute.xlu0 %1000
      %1002 = vrot.lane.b32.xlu0 %v775, 32
      %v1003 = vpop.permute.xlu0 %1002
      %1004 = vrot.lane.b32.xlu0 %v778, 32
      %v1005 = vpop.permute.xlu0 %1004
      %1006 = vrot.lane.b32.xlu0 %v780, 32
      %v1007 = vpop.permute.xlu0 %1006
      %1008 = vrot.lane.b32.xlu0 %v783, 32
      %v1009 = vpop.permute.xlu0 %1008
      %1010 = vrot.lane.b32.xlu0 %v785, 32
      %v1011 = vpop.permute.xlu0 %1010
      %1012 = vrot.lane.b32.xlu0 %v788, 32
      %v1013 = vpop.permute.xlu0 %1012
      %1014 = vrot.lane.b32.xlu0 %v790, 32
      %v1015 = vpop.permute.xlu0 %1014
      %1016 = vrot.lane.b32.xlu0 %v793, 32
      %v1017 = vpop.permute.xlu0 %1016
      %1018 = vrot.lane.b32.xlu0 %v795, 32
      %v1019 = vpop.permute.xlu0 %1018
      %1020 = vrot.lane.b32.xlu0 %v798, 32
      %v1021 = vpop.permute.xlu0 %1020
      %1022 = vrot.lane.b32.xlu0 %v800, 32
      %v1023 = vpop.permute.xlu0 %1022
      %1024 = vrot.lane.b32.xlu0 %v803, 32
      %v1025 = vpop.permute.xlu0 %1024
      %1026 = vrot.lane.b32.xlu0 %v805, 32
      %v1027 = vpop.permute.xlu0 %1026
      %1028 = vrot.lane.b32.xlu0 %v808, 32
      %v1029 = vpop.permute.xlu0 %1028
      %1030 = vrot.lane.b32.xlu0 %v810, 32
      %v1031 = vpop.permute.xlu0 %1030
      %1032 = vrot.lane.b32.xlu0 %v813, 32
      %v1033 = vpop.permute.xlu0 %1032
      %1034 = vrot.lane.b32.xlu0 %v815, 32
      %v1035 = vpop.permute.xlu0 %1034
      %1036 = vrot.lane.b32.xlu0 %v818, 32
      %v1037 = vpop.permute.xlu0 %1036
      %1038 = vrot.lane.b32.xlu0 %v820, 32
      %v1039 = vpop.permute.xlu0 %1038
      %1040 = vrot.lane.b32.xlu0 %v823, 32
      %v1041 = vpop.permute.xlu0 %1040
      %1042 = vrot.lane.b32.xlu0 %v825, 32
      %v1043 = vpop.permute.xlu0 %1042
      %1076 = vrot.lane.b32.xlu0 %v565, 48
      %v1077 = vpop.permute.xlu0 %1076
      %1078 = vrot.lane.b32.xlu0 %v566, 48
      %v1079 = vpop.permute.xlu0 %1078
      %1080 = vrot.lane.b32.xlu0 %v568, 48
      %v1081 = vpop.permute.xlu0 %1080
      %1082 = vrot.lane.b32.xlu0 %v569, 48
      %v1083 = vpop.permute.xlu0 %1082
      %1084 = vrot.lane.b32.xlu0 %v571, 48
      %v1085 = vpop.permute.xlu0 %1084
      %1086 = vrot.lane.b32.xlu0 %v572, 48
      %v1087 = vpop.permute.xlu0 %1086
      %1088 = vrot.lane.b32.xlu0 %v574, 48
      %v1089 = vpop.permute.xlu0 %1088
      %1090 = vrot.lane.b32.xlu0 %v575, 48
      %v1091 = vpop.permute.xlu0 %1090
      %1092 = vrot.lane.b32.xlu0 %v577, 48
      %v1093 = vpop.permute.xlu0 %1092
      %1094 = vrot.lane.b32.xlu0 %v578, 48
      %v1095 = vpop.permute.xlu0 %1094
      %1096 = vrot.lane.b32.xlu0 %v580, 48
      %v1097 = vpop.permute.xlu0 %1096
      %1098 = vrot.lane.b32.xlu0 %v581, 48
      %v1099 = vpop.permute.xlu0 %1098
      %1100 = vrot.lane.b32.xlu0 %v583, 48
      %v1101 = vpop.permute.xlu0 %1100
      %1102 = vrot.lane.b32.xlu0 %v584, 48
      %v1103 = vpop.permute.xlu0 %1102
      %1104 = vrot.lane.b32.xlu0 %v586, 48
      %v1105 = vpop.permute.xlu0 %1104
      %1106 = vrot.lane.b32.xlu0 %v587, 48
      %v1107 = vpop.permute.xlu0 %1106
      %1108 = vrot.lane.b32.xlu0 %v589, 48
      %v1109 = vpop.permute.xlu0 %1108
      %1110 = vrot.lane.b32.xlu0 %v590, 48
      %v1111 = vpop.permute.xlu0 %1110
      %1112 = vrot.lane.b32.xlu0 %v592, 48
      %v1113 = vpop.permute.xlu0 %1112
      %1114 = vrot.lane.b32.xlu0 %v593, 48
      %v1115 = vpop.permute.xlu0 %1114
      %1116 = vrot.lane.b32.xlu0 %v595, 48
      %v1117 = vpop.permute.xlu0 %1116
      %1118 = vrot.lane.b32.xlu0 %v596, 48
      %v1119 = vpop.permute.xlu0 %1118
      %1120 = vrot.lane.b32.xlu0 %v598, 48
      %v1121 = vpop.permute.xlu0 %1120
      %1122 = vrot.lane.b32.xlu0 %v599, 48
      %v1123 = vpop.permute.xlu0 %1122
      %1124 = vrot.lane.b32.xlu0 %v601, 48
      %v1125 = vpop.permute.xlu0 %1124
      %1126 = vrot.lane.b32.xlu0 %v602, 48
      %v1127 = vpop.permute.xlu0 %1126
      %1128 = vrot.lane.b32.xlu0 %v604, 48
      %v1129 = vpop.permute.xlu0 %1128
      %1130 = vrot.lane.b32.xlu0 %v605, 48
      %v1131 = vpop.permute.xlu0 %1130
      %1132 = vrot.lane.b32.xlu0 %v607, 48
      %v1133 = vpop.permute.xlu0 %1132
      %1134 = vrot.lane.b32.xlu0 %v608, 48
      %v1135 = vpop.permute.xlu0 %1134
      %1136 = vrot.lane.b32.xlu0 %v610, 48
      %v1137 = vpop.permute.xlu0 %1136
      %1138 = vrot.lane.b32.xlu0 %v611, 48
      %v1139 = vpop.permute.xlu0 %1138
      %1172 = vrot.lane.b32.xlu0 %v672, 64
      %v1173 = vpop.permute.xlu0 %1172
      %1174 = vrot.lane.b32.xlu0 %v674, 64
      %v1175 = vpop.permute.xlu0 %1174
      %1176 = vrot.lane.b32.xlu0 %v677, 64
      %v1177 = vpop.permute.xlu0 %1176
      %1178 = vrot.lane.b32.xlu0 %v679, 64
      %v1179 = vpop.permute.xlu0 %1178
      %1180 = vrot.lane.b32.xlu0 %v682, 64
      %v1181 = vpop.permute.xlu0 %1180
      %1182 = vrot.lane.b32.xlu0 %v684, 64
      %v1183 = vpop.permute.xlu0 %1182
      %1184 = vrot.lane.b32.xlu0 %v687, 64
      %v1185 = vpop.permute.xlu0 %1184
      %1186 = vrot.lane.b32.xlu0 %v689, 64
      %v1187 = vpop.permute.xlu0 %1186
      %1188 = vrot.lane.b32.xlu0 %v692, 64
      %v1189 = vpop.permute.xlu0 %1188
      %1190 = vrot.lane.b32.xlu0 %v694, 64
      %v1191 = vpop.permute.xlu0 %1190
      %1192 = vrot.lane.b32.xlu0 %v697, 64
      %v1193 = vpop.permute.xlu0 %1192
      %1194 = vrot.lane.b32.xlu0 %v699, 64
      %v1195 = vpop.permute.xlu0 %1194
      %1196 = vrot.lane.b32.xlu0 %v702, 64
      %v1197 = vpop.permute.xlu0 %1196
      %1198 = vrot.lane.b32.xlu0 %v704, 64
      %v1199 = vpop.permute.xlu0 %1198
      %1200 = vrot.lane.b32.xlu0 %v707, 64
      %v1201 = vpop.permute.xlu0 %1200
      %1202 = vrot.lane.b32.xlu0 %v709, 64
      %v1203 = vpop.permute.xlu0 %1202
      %1204 = vrot.lane.b32.xlu0 %v712, 64
      %v1205 = vpop.permute.xlu0 %1204
      %1206 = vrot.lane.b32.xlu0 %v714, 64
      %v1207 = vpop.permute.xlu0 %1206
      %1208 = vrot.lane.b32.xlu0 %v717, 64
      %v1209 = vpop.permute.xlu0 %1208
      %1210 = vrot.lane.b32.xlu0 %v719, 64
      %v1211 = vpop.permute.xlu0 %1210
      %1212 = vrot.lane.b32.xlu0 %v722, 64
      %v1213 = vpop.permute.xlu0 %1212
      %1214 = vrot.lane.b32.xlu0 %v724, 64
      %v1215 = vpop.permute.xlu0 %1214
      %1216 = vrot.lane.b32.xlu0 %v727, 64
      %v1217 = vpop.permute.xlu0 %1216
      %1218 = vrot.lane.b32.xlu0 %v729, 64
      %v1219 = vpop.permute.xlu0 %1218
      %1220 = vrot.lane.b32.xlu0 %v732, 64
      %v1221 = vpop.permute.xlu0 %1220
      %1222 = vrot.lane.b32.xlu0 %v734, 64
      %v1223 = vpop.permute.xlu0 %1222
      %1224 = vrot.lane.b32.xlu0 %v737, 64
      %v1225 = vpop.permute.xlu0 %1224
      %1226 = vrot.lane.b32.xlu0 %v739, 64
      %v1227 = vpop.permute.xlu0 %1226
      %1228 = vrot.lane.b32.xlu0 %v742, 64
      %v1229 = vpop.permute.xlu0 %1228
      %1230 = vrot.lane.b32.xlu0 %v744, 64
      %v1231 = vpop.permute.xlu0 %1230
      %1232 = vrot.lane.b32.xlu0 %v831, 64
      %v1233 = vpop.permute.xlu0 %1232
      %1234 = vrot.lane.b32.xlu0 %v833, 64
      %v1235 = vpop.permute.xlu0 %1234
      %1268 = vrot.lane.b32.xlu0 %v753, 80
      %v1269 = vpop.permute.xlu0 %1268
      %1270 = vrot.lane.b32.xlu0 %v755, 80
      %v1271 = vpop.permute.xlu0 %1270
      %1272 = vrot.lane.b32.xlu0 %v758, 80
      %v1273 = vpop.permute.xlu0 %1272
      %1274 = vrot.lane.b32.xlu0 %v760, 80
      %v1275 = vpop.permute.xlu0 %1274
      %1276 = vrot.lane.b32.xlu0 %v763, 80
      %v1277 = vpop.permute.xlu0 %1276
      %1278 = vrot.lane.b32.xlu0 %v765, 80
      %v1279 = vpop.permute.xlu0 %1278
      %1280 = vrot.lane.b32.xlu0 %v768, 80
      %v1281 = vpop.permute.xlu0 %1280
      %1282 = vrot.lane.b32.xlu0 %v770, 80
      %v1283 = vpop.permute.xlu0 %1282
      %1284 = vrot.lane.b32.xlu0 %v773, 80
      %v1285 = vpop.permute.xlu0 %1284
      %1286 = vrot.lane.b32.xlu0 %v775, 80
      %v1287 = vpop.permute.xlu0 %1286
      %1288 = vrot.lane.b32.xlu0 %v778, 80
      %v1289 = vpop.permute.xlu0 %1288
      %1290 = vrot.lane.b32.xlu0 %v780, 80
      %v1291 = vpop.permute.xlu0 %1290
      %1292 = vrot.lane.b32.xlu0 %v783, 80
      %v1293 = vpop.permute.xlu0 %1292
      %1294 = vrot.lane.b32.xlu0 %v785, 80
      %v1295 = vpop.permute.xlu0 %1294
      %1296 = vrot.lane.b32.xlu0 %v788, 80
      %v1297 = vpop.permute.xlu0 %1296
      %1298 = vrot.lane.b32.xlu0 %v790, 80
      %v1299 = vpop.permute.xlu0 %1298
      %1300 = vrot.lane.b32.xlu0 %v793, 80
      %v1301 = vpop.permute.xlu0 %1300
      %1302 = vrot.lane.b32.xlu0 %v795, 80
      %v1303 = vpop.permute.xlu0 %1302
      %1304 = vrot.lane.b32.xlu0 %v798, 80
      %v1305 = vpop.permute.xlu0 %1304
      %1306 = vrot.lane.b32.xlu0 %v800, 80
      %v1307 = vpop.permute.xlu0 %1306
      %1308 = vrot.lane.b32.xlu0 %v803, 80
      %v1309 = vpop.permute.xlu0 %1308
      %1310 = vrot.lane.b32.xlu0 %v805, 80
      %v1311 = vpop.permute.xlu0 %1310
      %1312 = vrot.lane.b32.xlu0 %v808, 80
      %v1313 = vpop.permute.xlu0 %1312
      %1314 = vrot.lane.b32.xlu0 %v810, 80
      %v1315 = vpop.permute.xlu0 %1314
      %1316 = vrot.lane.b32.xlu0 %v813, 80
      %v1317 = vpop.permute.xlu0 %1316
      %1318 = vrot.lane.b32.xlu0 %v815, 80
      %v1319 = vpop.permute.xlu0 %1318
      %1320 = vrot.lane.b32.xlu0 %v818, 80
      %v1321 = vpop.permute.xlu0 %1320
      %1322 = vrot.lane.b32.xlu0 %v820, 80
      %v1323 = vpop.permute.xlu0 %1322
      %1324 = vrot.lane.b32.xlu0 %v823, 80
      %v1325 = vpop.permute.xlu0 %1324
      %1326 = vrot.lane.b32.xlu0 %v825, 80
      %v1327 = vpop.permute.xlu0 %1326
      %1328 = vrot.lane.b32.xlu0 %v836, 80
      %v1329 = vpop.permute.xlu0 %1328
      %1330 = vrot.lane.b32.xlu0 %v838, 80
      %v1331 = vpop.permute.xlu0 %1330
      %1364 = vrot.lane.b32.xlu0 %v568, 96
      %v1365 = vpop.permute.xlu0 %1364
      %1366 = vrot.lane.b32.xlu0 %v569, 96
      %v1367 = vpop.permute.xlu0 %1366
      %1368 = vrot.lane.b32.xlu0 %v571, 96
      %v1369 = vpop.permute.xlu0 %1368
      %1370 = vrot.lane.b32.xlu0 %v572, 96
      %v1371 = vpop.permute.xlu0 %1370
      %1372 = vrot.lane.b32.xlu0 %v574, 96
      %v1373 = vpop.permute.xlu0 %1372
      %1374 = vrot.lane.b32.xlu0 %v575, 96
      %v1375 = vpop.permute.xlu0 %1374
      %1376 = vrot.lane.b32.xlu0 %v577, 96
      %v1377 = vpop.permute.xlu0 %1376
      %1378 = vrot.lane.b32.xlu0 %v578, 96
      %v1379 = vpop.permute.xlu0 %1378
      %1380 = vrot.lane.b32.xlu0 %v580, 96
      %v1381 = vpop.permute.xlu0 %1380
      %1382 = vrot.lane.b32.xlu0 %v581, 96
      %v1383 = vpop.permute.xlu0 %1382
      %1384 = vrot.lane.b32.xlu0 %v583, 96
      %v1385 = vpop.permute.xlu0 %1384
      %1386 = vrot.lane.b32.xlu0 %v584, 96
      %v1387 = vpop.permute.xlu0 %1386
      %1388 = vrot.lane.b32.xlu0 %v586, 96
      %v1389 = vpop.permute.xlu0 %1388
      %1390 = vrot.lane.b32.xlu0 %v587, 96
      %v1391 = vpop.permute.xlu0 %1390
      %1392 = vrot.lane.b32.xlu0 %v589, 96
      %v1393 = vpop.permute.xlu0 %1392
      %1394 = vrot.lane.b32.xlu0 %v590, 96
      %v1395 = vpop.permute.xlu0 %1394
      %1396 = vrot.lane.b32.xlu0 %v592, 96
      %v1397 = vpop.permute.xlu0 %1396
      %1398 = vrot.lane.b32.xlu0 %v593, 96
      %v1399 = vpop.permute.xlu0 %1398
      %1400 = vrot.lane.b32.xlu0 %v595, 96
      %v1401 = vpop.permute.xlu0 %1400
      %1402 = vrot.lane.b32.xlu0 %v596, 96
      %v1403 = vpop.permute.xlu0 %1402
      %1404 = vrot.lane.b32.xlu0 %v598, 96
      %v1405 = vpop.permute.xlu0 %1404
      %1406 = vrot.lane.b32.xlu0 %v599, 96
      %v1407 = vpop.permute.xlu0 %1406
      %1408 = vrot.lane.b32.xlu0 %v601, 96
      %v1409 = vpop.permute.xlu0 %1408
      %1410 = vrot.lane.b32.xlu0 %v602, 96
      %v1411 = vpop.permute.xlu0 %1410
      %1412 = vrot.lane.b32.xlu0 %v604, 96
      %v1413 = vpop.permute.xlu0 %1412
      %1414 = vrot.lane.b32.xlu0 %v605, 96
      %v1415 = vpop.permute.xlu0 %1414
      %1416 = vrot.lane.b32.xlu0 %v607, 96
      %v1417 = vpop.permute.xlu0 %1416
      %1418 = vrot.lane.b32.xlu0 %v608, 96
      %v1419 = vpop.permute.xlu0 %1418
      %1420 = vrot.lane.b32.xlu0 %v610, 96
      %v1421 = vpop.permute.xlu0 %1420
      %1422 = vrot.lane.b32.xlu0 %v611, 96
      %v1423 = vpop.permute.xlu0 %1422
      %1424 = vrot.lane.b32.xlu0 %v613, 96
      %v1425 = vpop.permute.xlu0 %1424
      %1426 = vrot.lane.b32.xlu0 %v614, 96
      %v1427 = vpop.permute.xlu0 %1426
      %1460 = vrot.lane.b32.xlu0 %v677, 112
      %v1461 = vpop.permute.xlu0 %1460
      %1462 = vrot.lane.b32.xlu0 %v679, 112
      %v1463 = vpop.permute.xlu0 %1462
      %1464 = vrot.lane.b32.xlu0 %v682, 112
      %v1465 = vpop.permute.xlu0 %1464
      %1466 = vrot.lane.b32.xlu0 %v684, 112
      %v1467 = vpop.permute.xlu0 %1466
      %1468 = vrot.lane.b32.xlu0 %v687, 112
      %v1469 = vpop.permute.xlu0 %1468
      %1470 = vrot.lane.b32.xlu0 %v689, 112
      %v1471 = vpop.permute.xlu0 %1470
      %1472 = vrot.lane.b32.xlu0 %v692, 112
      %v1473 = vpop.permute.xlu0 %1472
      %1474 = vrot.lane.b32.xlu0 %v694, 112
      %v1475 = vpop.permute.xlu0 %1474
      %1476 = vrot.lane.b32.xlu0 %v697, 112
      %v1477 = vpop.permute.xlu0 %1476
      %1478 = vrot.lane.b32.xlu0 %v699, 112
      %v1479 = vpop.permute.xlu0 %1478
      %1480 = vrot.lane.b32.xlu0 %v702, 112
      %v1481 = vpop.permute.xlu0 %1480
      %1482 = vrot.lane.b32.xlu0 %v704, 112
      %v1483 = vpop.permute.xlu0 %1482
      %1484 = vrot.lane.b32.xlu0 %v707, 112
      %v1485 = vpop.permute.xlu0 %1484
      %1486 = vrot.lane.b32.xlu0 %v709, 112
      %v1487 = vpop.permute.xlu0 %1486
      %1488 = vrot.lane.b32.xlu0 %v712, 112
      %v1489 = vpop.permute.xlu0 %1488
      %1490 = vrot.lane.b32.xlu0 %v714, 112
      %v1491 = vpop.permute.xlu0 %1490
      %1492 = vrot.lane.b32.xlu0 %v717, 112
      %v1493 = vpop.permute.xlu0 %1492
      %1494 = vrot.lane.b32.xlu0 %v719, 112
      %v1495 = vpop.permute.xlu0 %1494
      %1496 = vrot.lane.b32.xlu0 %v722, 112
      %v1497 = vpop.permute.xlu0 %1496
      %1498 = vrot.lane.b32.xlu0 %v724, 112
      %v1499 = vpop.permute.xlu0 %1498
      %1500 = vrot.lane.b32.xlu0 %v727, 112
      %v1501 = vpop.permute.xlu0 %1500
      %1502 = vrot.lane.b32.xlu0 %v729, 112
      %v1503 = vpop.permute.xlu0 %1502
      %1504 = vrot.lane.b32.xlu0 %v732, 112
      %v1505 = vpop.permute.xlu0 %1504
      %1506 = vrot.lane.b32.xlu0 %v734, 112
      %v1507 = vpop.permute.xlu0 %1506
      %1508 = vrot.lane.b32.xlu0 %v737, 112
      %v1509 = vpop.permute.xlu0 %1508
      %1510 = vrot.lane.b32.xlu0 %v739, 112
      %v1511 = vpop.permute.xlu0 %1510
      %1512 = vrot.lane.b32.xlu0 %v742, 112
      %v1513 = vpop.permute.xlu0 %1512
      %1514 = vrot.lane.b32.xlu0 %v744, 112
      %v1515 = vpop.permute.xlu0 %1514
      %1516 = vrot.lane.b32.xlu0 %v831, 112
      %v1517 = vpop.permute.xlu0 %1516
      %1518 = vrot.lane.b32.xlu0 %v833, 112
      %v1519 = vpop.permute.xlu0 %1518
      %1520 = vrot.lane.b32.xlu0 %v844, 112
      %v1521 = vpop.permute.xlu0 %1520
      %1522 = vrot.lane.b32.xlu0 %v846, 112
      %v1523 = vpop.permute.xlu0 %1522
      %v1556 = vsel %vm359, %v562, %v885
      %v1557 = vsel %vm359, %v563, %v887
      %v1558 = vsel %vm359, %v565, %v889
      %v1559 = vsel %vm359, %v566, %v891
      %v1560 = vsel %vm359, %v568, %v893
      %v1561 = vsel %vm359, %v569, %v895
      %v1562 = vsel %vm359, %v571, %v897
      %v1563 = vsel %vm359, %v572, %v899
      %v1564 = vsel %vm359, %v574, %v901
      %v1565 = vsel %vm359, %v575, %v903
      %v1566 = vsel %vm359, %v577, %v905
      %v1567 = vsel %vm359, %v578, %v907
      %v1568 = vsel %vm359, %v580, %v909
      %v1569 = vsel %vm359, %v581, %v911
      %v1570 = vsel %vm359, %v583, %v913
      %v1571 = vsel %vm359, %v584, %v915
      %v1572 = vsel %vm359, %v586, %v917
      %v1573 = vsel %vm359, %v587, %v919
      %v1574 = vsel %vm359, %v589, %v921
      %v1575 = vsel %vm359, %v590, %v923
      %v1576 = vsel %vm359, %v592, %v925
      %v1577 = vsel %vm359, %v593, %v927
      %v1578 = vsel %vm359, %v595, %v929
      %v1579 = vsel %vm359, %v596, %v931
      %v1580 = vsel %vm359, %v598, %v933
      %v1581 = vsel %vm359, %v599, %v935
      %v1582 = vsel %vm359, %v601, %v937
      %v1583 = vsel %vm359, %v602, %v939
      %v1584 = vsel %vm359, %v604, %v941
      %v1585 = vsel %vm359, %v605, %v943
      %v1586 = vsel %vm359, %v607, %v945
      %v1587 = vsel %vm359, %v608, %v947
      %vm1588 = vcmask 261120
      %v1589 = vsel %vm1588, %v1556, %v981
      %v1590 = vsel %vm1588, %v1557, %v983
      %v1591 = vsel %vm1588, %v1558, %v985
      %v1592 = vsel %vm1588, %v1559, %v987
      %v1593 = vsel %vm1588, %v1560, %v989
      %v1594 = vsel %vm1588, %v1561, %v991
      %v1595 = vsel %vm1588, %v1562, %v993
      %v1596 = vsel %vm1588, %v1563, %v995
      %v1597 = vsel %vm1588, %v1564, %v997
      %v1598 = vsel %vm1588, %v1565, %v999
      %v1599 = vsel %vm1588, %v1566, %v1001
      %v1600 = vsel %vm1588, %v1567, %v1003
      %v1601 = vsel %vm1588, %v1568, %v1005
      %v1602 = vsel %vm1588, %v1569, %v1007
      %v1603 = vsel %vm1588, %v1570, %v1009
      %v1604 = vsel %vm1588, %v1571, %v1011
      %v1605 = vsel %vm1588, %v1572, %v1013
      %v1606 = vsel %vm1588, %v1573, %v1015
      %v1607 = vsel %vm1588, %v1574, %v1017
      %v1608 = vsel %vm1588, %v1575, %v1019
      %v1609 = vsel %vm1588, %v1576, %v1021
      %v1610 = vsel %vm1588, %v1577, %v1023
      %v1611 = vsel %vm1588, %v1578, %v1025
      %v1612 = vsel %vm1588, %v1579, %v1027
      %v1613 = vsel %vm1588, %v1580, %v1029
      %v1614 = vsel %vm1588, %v1581, %v1031
      %v1615 = vsel %vm1588, %v1582, %v1033
      %v1616 = vsel %vm1588, %v1583, %v1035
      %v1617 = vsel %vm1588, %v1584, %v1037
      %v1618 = vsel %vm1588, %v1585, %v1039
      %v1619 = vsel %vm1588, %v1586, %v1041
      %v1620 = vsel %vm1588, %v1587, %v1043
      %vm1621 = vcmask 392192
      %v1622 = vsel %vm1621, %v1589, %v1077
      %v1623 = vsel %vm1621, %v1590, %v1079
      %v1624 = vsel %vm1621, %v1591, %v1081
      %v1625 = vsel %vm1621, %v1592, %v1083
      %v1626 = vsel %vm1621, %v1593, %v1085
      %v1627 = vsel %vm1621, %v1594, %v1087
      %v1628 = vsel %vm1621, %v1595, %v1089
      %v1629 = vsel %vm1621, %v1596, %v1091
      %v1630 = vsel %vm1621, %v1597, %v1093
      %v1631 = vsel %vm1621, %v1598, %v1095
      %v1632 = vsel %vm1621, %v1599, %v1097
      %v1633 = vsel %vm1621, %v1600, %v1099
      %v1634 = vsel %vm1621, %v1601, %v1101
      %v1635 = vsel %vm1621, %v1602, %v1103
      %v1636 = vsel %vm1621, %v1603, %v1105
      %v1637 = vsel %vm1621, %v1604, %v1107
      %v1638 = vsel %vm1621, %v1605, %v1109
      %v1639 = vsel %vm1621, %v1606, %v1111
      %v1640 = vsel %vm1621, %v1607, %v1113
      %v1641 = vsel %vm1621, %v1608, %v1115
      %v1642 = vsel %vm1621, %v1609, %v1117
      %v1643 = vsel %vm1621, %v1610, %v1119
      %v1644 = vsel %vm1621, %v1611, %v1121
      %v1645 = vsel %vm1621, %v1612, %v1123
      %v1646 = vsel %vm1621, %v1613, %v1125
      %v1647 = vsel %vm1621, %v1614, %v1127
      %v1648 = vsel %vm1621, %v1615, %v1129
      %v1649 = vsel %vm1621, %v1616, %v1131
      %v1650 = vsel %vm1621, %v1617, %v1133
      %v1651 = vsel %vm1621, %v1618, %v1135
      %v1652 = vsel %vm1621, %v1619, %v1137
      %v1653 = vsel %vm1621, %v1620, %v1139
      %vm1654 = vcmask 523264
      %v1655 = vsel %vm1654, %v1622, %v1173
      %v1656 = vsel %vm1654, %v1623, %v1175
      %v1657 = vsel %vm1654, %v1624, %v1177
      %v1658 = vsel %vm1654, %v1625, %v1179
      %v1659 = vsel %vm1654, %v1626, %v1181
      %v1660 = vsel %vm1654, %v1627, %v1183
      %v1661 = vsel %vm1654, %v1628, %v1185
      %v1662 = vsel %vm1654, %v1629, %v1187
      %v1663 = vsel %vm1654, %v1630, %v1189
      %v1664 = vsel %vm1654, %v1631, %v1191
      %v1665 = vsel %vm1654, %v1632, %v1193
      %v1666 = vsel %vm1654, %v1633, %v1195
      %v1667 = vsel %vm1654, %v1634, %v1197
      %v1668 = vsel %vm1654, %v1635, %v1199
      %v1669 = vsel %vm1654, %v1636, %v1201
      %v1670 = vsel %vm1654, %v1637, %v1203
      %v1671 = vsel %vm1654, %v1638, %v1205
      %v1672 = vsel %vm1654, %v1639, %v1207
      %v1673 = vsel %vm1654, %v1640, %v1209
      %v1674 = vsel %vm1654, %v1641, %v1211
      %v1675 = vsel %vm1654, %v1642, %v1213
      %v1676 = vsel %vm1654, %v1643, %v1215
      %v1677 = vsel %vm1654, %v1644, %v1217
      %v1678 = vsel %vm1654, %v1645, %v1219
      %v1679 = vsel %vm1654, %v1646, %v1221
      %v1680 = vsel %vm1654, %v1647, %v1223
      %v1681 = vsel %vm1654, %v1648, %v1225
      %v1682 = vsel %vm1654, %v1649, %v1227
      %v1683 = vsel %vm1654, %v1650, %v1229
      %v1684 = vsel %vm1654, %v1651, %v1231
      %v1685 = vsel %vm1654, %v1652, %v1233
      %v1686 = vsel %vm1654, %v1653, %v1235
      %vm1687 = vcmask 654336
      %v1688 = vsel %vm1687, %v1655, %v1269
      %v1689 = vsel %vm1687, %v1656, %v1271
      %v1690 = vsel %vm1687, %v1657, %v1273
      %v1691 = vsel %vm1687, %v1658, %v1275
      %v1692 = vsel %vm1687, %v1659, %v1277
      %v1693 = vsel %vm1687, %v1660, %v1279
      %v1694 = vsel %vm1687, %v1661, %v1281
      %v1695 = vsel %vm1687, %v1662, %v1283
      %v1696 = vsel %vm1687, %v1663, %v1285
      %v1697 = vsel %vm1687, %v1664, %v1287
      %v1698 = vsel %vm1687, %v1665, %v1289
      %v1699 = vsel %vm1687, %v1666, %v1291
      %v1700 = vsel %vm1687, %v1667, %v1293
      %v1701 = vsel %vm1687, %v1668, %v1295
      %v1702 = vsel %vm1687, %v1669, %v1297
      %v1703 = vsel %vm1687, %v1670, %v1299
      %v1704 = vsel %vm1687, %v1671, %v1301
      %v1705 = vsel %vm1687, %v1672, %v1303
      %v1706 = vsel %vm1687, %v1673, %v1305
      %v1707 = vsel %vm1687, %v1674, %v1307
      %v1708 = vsel %vm1687, %v1675, %v1309
      %v1709 = vsel %vm1687, %v1676, %v1311
      %v1710 = vsel %vm1687, %v1677, %v1313
      %v1711 = vsel %vm1687, %v1678, %v1315
      %v1712 = vsel %vm1687, %v1679, %v1317
      %v1713 = vsel %vm1687, %v1680, %v1319
      %v1714 = vsel %vm1687, %v1681, %v1321
      %v1715 = vsel %vm1687, %v1682, %v1323
      %v1716 = vsel %vm1687, %v1683, %v1325
      %v1717 = vsel %vm1687, %v1684, %v1327
      %v1718 = vsel %vm1687, %v1685, %v1329
      %v1719 = vsel %vm1687, %v1686, %v1331
      %vm1720 = vcmask 785408
      %v1721 = vsel %vm1720, %v1688, %v1365
      %v1722 = vsel %vm1720, %v1689, %v1367
      %v1723 = vsel %vm1720, %v1690, %v1369
      %v1724 = vsel %vm1720, %v1691, %v1371
      %v1725 = vsel %vm1720, %v1692, %v1373
      %v1726 = vsel %vm1720, %v1693, %v1375
      %v1727 = vsel %vm1720, %v1694, %v1377
      %v1728 = vsel %vm1720, %v1695, %v1379
      %v1729 = vsel %vm1720, %v1696, %v1381
      %v1730 = vsel %vm1720, %v1697, %v1383
      %v1731 = vsel %vm1720, %v1698, %v1385
      %v1732 = vsel %vm1720, %v1699, %v1387
      %v1733 = vsel %vm1720, %v1700, %v1389
      %v1734 = vsel %vm1720, %v1701, %v1391
      %v1735 = vsel %vm1720, %v1702, %v1393
      %v1736 = vsel %vm1720, %v1703, %v1395
      %v1737 = vsel %vm1720, %v1704, %v1397
      %v1738 = vsel %vm1720, %v1705, %v1399
      %v1739 = vsel %vm1720, %v1706, %v1401
      %v1740 = vsel %vm1720, %v1707, %v1403
      %v1741 = vsel %vm1720, %v1708, %v1405
      %v1742 = vsel %vm1720, %v1709, %v1407
      %v1743 = vsel %vm1720, %v1710, %v1409
      %v1744 = vsel %vm1720, %v1711, %v1411
      %v1745 = vsel %vm1720, %v1712, %v1413
      %v1746 = vsel %vm1720, %v1713, %v1415
      %v1747 = vsel %vm1720, %v1714, %v1417
      %v1748 = vsel %vm1720, %v1715, %v1419
      %v1749 = vsel %vm1720, %v1716, %v1421
      %v1750 = vsel %vm1720, %v1717, %v1423
      %v1751 = vsel %vm1720, %v1718, %v1425
      %v1752 = vsel %vm1720, %v1719, %v1427
      %vm1753 = vcmask 916480
      %v1754 = vsel %vm1753, %v1721, %v1461
      %v1755 = vsel %vm1753, %v1722, %v1463
      %v1756 = vsel %vm1753, %v1723, %v1465
      %v1757 = vsel %vm1753, %v1724, %v1467
      %v1758 = vsel %vm1753, %v1725, %v1469
      %v1759 = vsel %vm1753, %v1726, %v1471
      %v1760 = vsel %vm1753, %v1727, %v1473
      %v1761 = vsel %vm1753, %v1728, %v1475
      %v1762 = vsel %vm1753, %v1729, %v1477
      %v1763 = vsel %vm1753, %v1730, %v1479
      %v1764 = vsel %vm1753, %v1731, %v1481
      %v1765 = vsel %vm1753, %v1732, %v1483
      %v1766 = vsel %vm1753, %v1733, %v1485
      %v1767 = vsel %vm1753, %v1734, %v1487
      %v1768 = vsel %vm1753, %v1735, %v1489
      %v1769 = vsel %vm1753, %v1736, %v1491
      %v1770 = vsel %vm1753, %v1737, %v1493
      %v1771 = vsel %vm1753, %v1738, %v1495
      %v1772 = vsel %vm1753, %v1739, %v1497
      %v1773 = vsel %vm1753, %v1740, %v1499
      %v1774 = vsel %vm1753, %v1741, %v1501
      %v1775 = vsel %vm1753, %v1742, %v1503
      %v1776 = vsel %vm1753, %v1743, %v1505
      %v1777 = vsel %vm1753, %v1744, %v1507
      %v1778 = vsel %vm1753, %v1745, %v1509
      %v1779 = vsel %vm1753, %v1746, %v1511
      %v1780 = vsel %vm1753, %v1747, %v1513
      %v1781 = vsel %vm1753, %v1748, %v1515
      %v1782 = vsel %vm1753, %v1749, %v1517
      %v1783 = vsel %vm1753, %v1750, %v1519
      %v1784 = vsel %vm1753, %v1751, %v1521
      %v1785 = vsel %vm1753, %v1752, %v1523
      %v1786 = vpack.c.bf16 %v1755, %v1754
      %v1787 = vpack.c.bf16 %v760, %v758
      %v1788 = vpack.c.bf16 %v1757, %v1756
      %v1789 = vpack.c.bf16 %v765, %v763
      %v1790 = vpack.c.bf16 %v1759, %v1758
      %v1791 = vpack.c.bf16 %v770, %v768
      %v1792 = vpack.c.bf16 %v1761, %v1760
      %v1793 = vpack.c.bf16 %v775, %v773
      %v1794 = vpack.c.bf16 %v1763, %v1762
      %v1795 = vpack.c.bf16 %v780, %v778
      %v1796 = vpack.c.bf16 %v1765, %v1764
      %v1797 = vpack.c.bf16 %v785, %v783
      %v1798 = vpack.c.bf16 %v1767, %v1766
      %v1799 = vpack.c.bf16 %v790, %v788
      %v1800 = vpack.c.bf16 %v1769, %v1768
      %v1801 = vpack.c.bf16 %v795, %v793
      %v1802 = vpack.c.bf16 %v1771, %v1770
      %v1803 = vpack.c.bf16 %v800, %v798
      %v1804 = vpack.c.bf16 %v1773, %v1772
      %v1805 = vpack.c.bf16 %v805, %v803
      %v1806 = vpack.c.bf16 %v1775, %v1774
      %v1807 = vpack.c.bf16 %v810, %v808
      %v1808 = vpack.c.bf16 %v1777, %v1776
      %v1809 = vpack.c.bf16 %v815, %v813
      %v1810 = vpack.c.bf16 %v1779, %v1778
      %v1811 = vpack.c.bf16 %v820, %v818
      %v1812 = vpack.c.bf16 %v1781, %v1780
      %v1813 = vpack.c.bf16 %v825, %v823
      %v1814 = vpack.c.bf16 %v1783, %v1782
      %v1815 = vpack.c.bf16 %v838, %v836
      %v1816 = vpack.c.bf16 %v1785, %v1784
      %v1817 = vpack.c.bf16 %v851, %v849
      %v1818 = vld [vmem:[%s3] sm:$0xf]
      %v1819 = vld [vmem:[%s3 + $0x4] sm:$0xf]
      %v1820 = vld [vmem:[%s3 + $0x8] sm:$0xf]
      %v1821 = vld [vmem:[%s3 + $0xc] sm:$0xf]
      %v1822 = vld [vmem:[%s3 + $0x10] sm:$0xf]
      %v1823 = vld [vmem:[%s3 + $0x14] sm:$0xf]
      %v1824 = vld [vmem:[%s3 + $0x18] sm:$0xf]
      %v1825 = vld [vmem:[%s3 + $0x1c] sm:$0xf]
      %v1826 = vld [vmem:[%s3 + $0x20] sm:$0xf]
      %v1827 = vld [vmem:[%s3 + $0x24] sm:$0xf]
      %v1828 = vld [vmem:[%s3 + $0x28] sm:$0xf]
      %v1829 = vld [vmem:[%s3 + $0x2c] sm:$0xf]
      %v1830 = vld [vmem:[%s3 + $0x30] sm:$0xf]
      %v1831 = vld [vmem:[%s3 + $0x34] sm:$0xf]
      %v1832 = vld [vmem:[%s3 + $0x38] sm:$0xf]
      %v1833 = vld [vmem:[%s3 + $0x3c] sm:$0xf]
      %v1834 = vld [vmem:[%s3 + $0x40] sm:$0xf]
      %v1835 = vld [vmem:[%s3 + $0x44] sm:$0xf]
      %v1836 = vld [vmem:[%s4] sm:$0x1]
      %v1838 = vlaneseq
      %v1839 = vshrl.u32 %v1838, 7
      %v1840 = vsub.s32 0, %v1839
      %v1841 = vrot.slane %v1836, %v1840
      %v1861 = vunpack.c.l.b16 %v1818
      %v1862 = vunpack.c.l.b16 %v1819
      %v1863 = vunpack.c.l.b16 %v1820
      %v1864 = vunpack.c.l.b16 %v1821
      %v1865 = vunpack.c.l.b16 %v1822
      %v1866 = vunpack.c.l.b16 %v1823
      %v1867 = vunpack.c.l.b16 %v1824
      %v1868 = vunpack.c.l.b16 %v1825
      %v1869 = vunpack.c.l.b16 %v1826
      %v1870 = vunpack.c.l.b16 %v1827
      %v1871 = vunpack.c.l.b16 %v1828
      %v1872 = vunpack.c.l.b16 %v1829
      %v1873 = vunpack.c.l.b16 %v1830
      %v1874 = vunpack.c.l.b16 %v1831
      %v1875 = vunpack.c.l.b16 %v1832
      %v1876 = vunpack.c.l.b16 %v1833
      %v1877 = vunpack.c.l.b16 %v1834
      %v1878 = vunpack.c.l.b16 %v1835
      %v1879 = vpack.c.b16 %v1862, %v1861
      %v1880 = vpack.c.b16 %v1864, %v1863
      %v1881 = vpack.c.b16 %v1866, %v1865
      %v1882 = vpack.c.b16 %v1868, %v1867
      %v1883 = vpack.c.b16 %v1870, %v1869
      %v1884 = vpack.c.b16 %v1872, %v1871
      %v1885 = vpack.c.b16 %v1874, %v1873
      %v1886 = vpack.c.b16 %v1876, %v1875
      %v1887 = vpack.c.b16 %v1878, %v1877
      %v1898 = vsel %vm359, %v1787, 0
      %v1901 = vsel %vm359, %v1789, 0
      %v1904 = vsel %vm359, %v1791, 0
      %v1907 = vsel %vm359, %v1793, 0
      %v1910 = vsel %vm359, %v1795, 0
      %v1913 = vsel %vm359, %v1797, 0
      %v1916 = vsel %vm359, %v1799, 0
      %v1919 = vsel %vm359, %v1801, 0
      %v1922 = vsel %vm359, %v1803, 0
      %v1925 = vsel %vm359, %v1805, 0
      %v1928 = vsel %vm359, %v1807, 0
      %v1931 = vsel %vm359, %v1809, 0
      %v1934 = vsel %vm359, %v1811, 0
      %v1937 = vsel %vm359, %v1813, 0
      %v1940 = vsel %vm359, %v1815, 0
      %v1943 = vsel %vm359, %v1817, 0
      %1945 = vmatprep.subr.bf16.mxu0 0
      %1946 = vmatpush1.bf16.msra.mxu0 %v1879
      %1947 = vmatprep.subr.bf16.mxu0 0
      %1948 = vmatpush1.bf16.msra.mxu0 %v1880
      %1949 = vmatprep.subr.bf16.mxu0 0
      %1950 = vmatpush1.bf16.msra.mxu0 %v1881
      %1951 = vmatprep.subr.bf16.mxu0 0
      %1952 = vmatpush1.bf16.msra.mxu0 %v1882
      %1953 = vmatprep.subr.bf16.mxu0 0
      %1954 = vmatpush1.bf16.msra.mxu0 %v1883
      %1955 = vmatprep.subr.bf16.mxu0 0
      %1956 = vmatpush1.bf16.msra.mxu0 %v1884
      %1957 = vmatprep.subr.bf16.mxu0 0
      %1958 = vmatpush1.bf16.msra.mxu0 %v1885
      %1959 = vmatprep.subr.bf16.mxu0 0
      %1960 = vmatpush1.bf16.msra.mxu0 %v1886
      %1961 = vmatprep.subr.bf16.mxu0 0
      %1962 = vmatpush1.bf16.msra.mxu0 %v1887
      %1963 = vmatprep.subr.bf16.mxu0 0
      %1964 = vmatpush1.bf16.msra.mxu0 0
      %1965 = vmatprep.subr.bf16.mxu0 0
      %1966 = vmatpush1.bf16.msra.mxu0 0
      %1967 = vmatprep.subr.bf16.mxu0 0
      %1968 = vmatpush1.bf16.msra.mxu0 0
      %1969 = vmatprep.subr.bf16.mxu0 0
      %1970 = vmatpush1.bf16.msra.mxu0 0
      %1971 = vmatprep.subr.bf16.mxu0 0
      %1972 = vmatpush1.bf16.msra.mxu0 0
      %1973 = vmatprep.subr.bf16.mxu0 0
      %1974 = vmatpush1.bf16.msra.mxu0 0
      %1975 = vmatprep.subr.bf16.mxu0 0
      %1976 = vmatpush1.bf16.msra.mxu0 0
      %1977 = vmatprep.mubr.bf16.mxu0 %v1898
      %1978 = vmatmul.mubr.bf16.gmra.mrb[0].mxu0 %v1786
      %v1979 = vpop.f32.mrb[0].mxu0
      %v1980 = vadd.f32 %v1841, %v1979
      %v1981 = vpop.f32.mrb[0].mxu0
      %v1982 = vpop.f32.mrb[0].mxu0
      %v1983 = vadd.f32 %v1841, %v1982
      %v1984 = vpop.f32.mrb[0].mxu0
      %1985 = vmatprep.mubr.bf16.mxu0 %v1901
      %1986 = vmatmul.mubr.bf16.gmra.mrb[0].mxu0 %v1788
      %v1987 = vpop.f32.mrb[0].mxu0
      %v1988 = vadd.f32 %v1841, %v1987
      %v1989 = vpop.f32.mrb[0].mxu0
      %v1990 = vpop.f32.mrb[0].mxu0
      %v1991 = vadd.f32 %v1841, %v1990
      %v1992 = vpop.f32.mrb[0].mxu0
      %1993 = vmatprep.mubr.bf16.mxu0 %v1904
      %1994 = vmatmul.mubr.bf16.gmra.mrb[0].mxu0 %v1790
      %v1995 = vpop.f32.mrb[0].mxu0
      %v1996 = vadd.f32 %v1841, %v1995
      %v1997 = vpop.f32.mrb[0].mxu0
      %v1998 = vpop.f32.mrb[0].mxu0
      %v1999 = vadd.f32 %v1841, %v1998
      %v2000 = vpop.f32.mrb[0].mxu0
      %2001 = vmatprep.mubr.bf16.mxu0 %v1907
      %2002 = vmatmul.mubr.bf16.gmra.mrb[0].mxu0 %v1792
      %v2003 = vpop.f32.mrb[0].mxu0
      %v2004 = vadd.f32 %v1841, %v2003
      %v2005 = vpop.f32.mrb[0].mxu0
      %v2006 = vpop.f32.mrb[0].mxu0
      %v2007 = vadd.f32 %v1841, %v2006
      %v2008 = vpop.f32.mrb[0].mxu0
      %2009 = vmatprep.mubr.bf16.mxu0 %v1910
      %2010 = vmatmul.mubr.bf16.gmra.mrb[0].mxu0 %v1794
      %v2011 = vpop.f32.mrb[0].mxu0
      %v2012 = vadd.f32 %v1841, %v2011
      %v2013 = vpop.f32.mrb[0].mxu0
      %v2014 = vpop.f32.mrb[0].mxu0
      %v2015 = vadd.f32 %v1841, %v2014
      %v2016 = vpop.f32.mrb[0].mxu0
      %2017 = vmatprep.mubr.bf16.mxu0 %v1913
      %2018 = vmatmul.mubr.bf16.gmra.mrb[0].mxu0 %v1796
      %v2019 = vpop.f32.mrb[0].mxu0
      %v2020 = vadd.f32 %v1841, %v2019
      %v2021 = vpop.f32.mrb[0].mxu0
      %v2022 = vpop.f32.mrb[0].mxu0
      %v2023 = vadd.f32 %v1841, %v2022
      %v2024 = vpop.f32.mrb[0].mxu0
      %2025 = vmatprep.mubr.bf16.mxu0 %v1916
      %2026 = vmatmul.mubr.bf16.gmra.mrb[0].mxu0 %v1798
      %v2027 = vpop.f32.mrb[0].mxu0
      %v2028 = vadd.f32 %v1841, %v2027
      %v2029 = vpop.f32.mrb[0].mxu0
      %v2030 = vpop.f32.mrb[0].mxu0
      %v2031 = vadd.f32 %v1841, %v2030
      %v2032 = vpop.f32.mrb[0].mxu0
      %2033 = vmatprep.mubr.bf16.mxu0 %v1919
      %2034 = vmatmul.mubr.bf16.gmra.mrb[0].mxu0 %v1800
      %v2035 = vpop.f32.mrb[0].mxu0
      %v2036 = vadd.f32 %v1841, %v2035
      %v2037 = vpop.f32.mrb[0].mxu0
      %v2038 = vpop.f32.mrb[0].mxu0
      %v2039 = vadd.f32 %v1841, %v2038
      %v2040 = vpop.f32.mrb[0].mxu0
      %2041 = vmatprep.mubr.bf16.mxu0 %v1922
      %2042 = vmatmul.mubr.bf16.gmra.mrb[0].mxu0 %v1802
      %v2043 = vpop.f32.mrb[0].mxu0
      %v2044 = vadd.f32 %v1841, %v2043
      %v2045 = vpop.f32.mrb[0].mxu0
      %v2046 = vpop.f32.mrb[0].mxu0
      %v2047 = vadd.f32 %v1841, %v2046
      %v2048 = vpop.f32.mrb[0].mxu0
      %2049 = vmatprep.mubr.bf16.mxu0 %v1925
      %2050 = vmatmul.mubr.bf16.gmra.mrb[0].mxu0 %v1804
      %v2051 = vpop.f32.mrb[0].mxu0
      %v2052 = vadd.f32 %v1841, %v2051
      %v2053 = vpop.f32.mrb[0].mxu0
      %v2054 = vpop.f32.mrb[0].mxu0
      %v2055 = vadd.f32 %v1841, %v2054
      %v2056 = vpop.f32.mrb[0].mxu0
      %2057 = vmatprep.mubr.bf16.mxu0 %v1928
      %2058 = vmatmul.mubr.bf16.gmra.mrb[0].mxu0 %v1806
      %v2059 = vpop.f32.mrb[0].mxu0
      %v2060 = vadd.f32 %v1841, %v2059
      %v2061 = vpop.f32.mrb[0].mxu0
      %v2062 = vpop.f32.mrb[0].mxu0
      %v2063 = vadd.f32 %v1841, %v2062
      %v2064 = vpop.f32.mrb[0].mxu0
      %2065 = vmatprep.mubr.bf16.mxu0 %v1931
      %2066 = vmatmul.mubr.bf16.gmra.mrb[0].mxu0 %v1808
      %v2067 = vpop.f32.mrb[0].mxu0
      %v2068 = vadd.f32 %v1841, %v2067
      %v2069 = vpop.f32.mrb[0].mxu0
      %v2070 = vpop.f32.mrb[0].mxu0
      %v2071 = vadd.f32 %v1841, %v2070
      %v2072 = vpop.f32.mrb[0].mxu0
      %2073 = vmatprep.mubr.bf16.mxu0 %v1934
      %2074 = vmatmul.mubr.bf16.gmra.mrb[0].mxu0 %v1810
      %v2075 = vpop.f32.mrb[0].mxu0
      %v2076 = vadd.f32 %v1841, %v2075
      %v2077 = vpop.f32.mrb[0].mxu0
      %v2078 = vpop.f32.mrb[0].mxu0
      %v2079 = vadd.f32 %v1841, %v2078
      %v2080 = vpop.f32.mrb[0].mxu0
      %2081 = vmatprep.mubr.bf16.mxu0 %v1937
      %2082 = vmatmul.mubr.bf16.gmra.mrb[0].mxu0 %v1812
      %v2083 = vpop.f32.mrb[0].mxu0
      %v2084 = vadd.f32 %v1841, %v2083
      %v2085 = vpop.f32.mrb[0].mxu0
      %v2086 = vpop.f32.mrb[0].mxu0
      %v2087 = vadd.f32 %v1841, %v2086
      %v2088 = vpop.f32.mrb[0].mxu0
      %2089 = vmatprep.mubr.bf16.mxu0 %v1940
      %2090 = vmatmul.mubr.bf16.gmra.mrb[0].mxu0 %v1814
      %v2091 = vpop.f32.mrb[0].mxu0
      %v2092 = vadd.f32 %v1841, %v2091
      %v2093 = vpop.f32.mrb[0].mxu0
      %v2094 = vpop.f32.mrb[0].mxu0
      %v2095 = vadd.f32 %v1841, %v2094
      %v2096 = vpop.f32.mrb[0].mxu0
      %2097 = vmatprep.mubr.bf16.mxu0 %v1943
      %2098 = vmatmul.mubr.bf16.gmra.mrb[0].mxu0 %v1816
      %v2099 = vpop.f32.mrb[0].mxu0
      %v2100 = vadd.f32 %v1841, %v2099
      %v2101 = vpop.f32.mrb[0].mxu0
      %v2102 = vpop.f32.mrb[0].mxu0
      %v2103 = vadd.f32 %v1841, %v2102
      %v2104 = vpop.f32.mrb[0].mxu0
      %2105 = vdwg.mxu0
      %v2106 = vmax.f32 %v1980, 0.0
      %v2107 = vmax.f32 %v1983, 0.0
      %v2108 = vmax.f32 %v1988, 0.0
      %v2109 = vmax.f32 %v1991, 0.0
      %v2110 = vmax.f32 %v1996, 0.0
      %v2111 = vmax.f32 %v1999, 0.0
      %v2112 = vmax.f32 %v2004, 0.0
      %v2113 = vmax.f32 %v2007, 0.0
      %v2114 = vmax.f32 %v2012, 0.0
      %v2115 = vmax.f32 %v2015, 0.0
      %v2116 = vmax.f32 %v2020, 0.0
      %v2117 = vmax.f32 %v2023, 0.0
      %v2118 = vmax.f32 %v2028, 0.0
      %v2119 = vmax.f32 %v2031, 0.0
      %v2120 = vmax.f32 %v2036, 0.0
      %v2121 = vmax.f32 %v2039, 0.0
      %v2122 = vmax.f32 %v2044, 0.0
      %v2123 = vmax.f32 %v2047, 0.0
      %v2124 = vmax.f32 %v2052, 0.0
      %v2125 = vmax.f32 %v2055, 0.0
      %v2126 = vmax.f32 %v2060, 0.0
      %v2127 = vmax.f32 %v2063, 0.0
      %v2128 = vmax.f32 %v2068, 0.0
      %v2129 = vmax.f32 %v2071, 0.0
      %v2130 = vmax.f32 %v2076, 0.0
      %v2131 = vmax.f32 %v2079, 0.0
      %v2132 = vmax.f32 %v2084, 0.0
      %v2133 = vmax.f32 %v2087, 0.0
      %v2134 = vmax.f32 %v2092, 0.0
      %v2135 = vmax.f32 %v2095, 0.0
      %v2136 = vmax.f32 %v2100, 0.0
      %v2137 = vmax.f32 %v2103, 0.0
      %2138 = vxpose.xlu0.b32.start [1/16] %v2106, 128
      %2139 = vxpose.xlu0.b32.cont [2/16] %v2107, 128
      %2140 = vxpose.xlu0.b32.cont [3/16] %v2108, 128
      %2141 = vxpose.xlu0.b32.cont [4/16] %v2109, 128
      %2142 = vxpose.xlu0.b32.cont [5/16] %v2110, 128
      %2143 = vxpose.xlu0.b32.cont [6/16] %v2111, 128
      %2144 = vxpose.xlu0.b32.cont [7/16] %v2112, 128
      %2145 = vxpose.xlu0.b32.cont [8/16] %v2113, 128
      %2146 = vxpose.xlu0.b32.cont [9/16] %v2114, 128
      %2147 = vxpose.xlu0.b32.cont [10/16] %v2115, 128
      %2148 = vxpose.xlu0.b32.cont [11/16] %v2116, 128
      %2149 = vxpose.xlu0.b32.cont [12/16] %v2117, 128
      %2150 = vxpose.xlu0.b32.cont [13/16] %v2118, 128
      %2151 = vxpose.xlu0.b32.cont [14/16] %v2119, 128
      %2152 = vxpose.xlu0.b32.cont [15/16] %v2120, 128
      %2153 = vxpose.xlu0.b32.end [16/16] %v2121, 128
      %v2154 = vpop.trf.xlu0
      %v2155 = vpop.trf.xlu0
      %v2156 = vpop.trf.xlu0
      %v2157 = vpop.trf.xlu0
      %v2158 = vpop.trf.xlu0
      %v2159 = vpop.trf.xlu0
      %v2160 = vpop.trf.xlu0
      %v2161 = vpop.trf.xlu0
      %v2162 = vpop.trf.xlu0
      %v2163 = vpop.trf.xlu0
      %v2164 = vpop.trf.xlu0
      %v2165 = vpop.trf.xlu0
      %v2166 = vpop.trf.xlu0
      %v2167 = vpop.trf.xlu0
      %v2168 = vpop.trf.xlu0
      %v2169 = vpop.trf.xlu0
      %2170 = vxpose.xlu0.b32.start [1/16] %v2122, 128
      %2171 = vxpose.xlu0.b32.cont [2/16] %v2123, 128
      %2172 = vxpose.xlu0.b32.cont [3/16] %v2124, 128
      %2173 = vxpose.xlu0.b32.cont [4/16] %v2125, 128
      %2174 = vxpose.xlu0.b32.cont [5/16] %v2126, 128
      %2175 = vxpose.xlu0.b32.cont [6/16] %v2127, 128
      %2176 = vxpose.xlu0.b32.cont [7/16] %v2128, 128
      %2177 = vxpose.xlu0.b32.cont [8/16] %v2129, 128
      %2178 = vxpose.xlu0.b32.cont [9/16] %v2130, 128
      %2179 = vxpose.xlu0.b32.cont [10/16] %v2131, 128
      %2180 = vxpose.xlu0.b32.cont [11/16] %v2132, 128
      %2181 = vxpose.xlu0.b32.cont [12/16] %v2133, 128
      %2182 = vxpose.xlu0.b32.cont [13/16] %v2134, 128
      %2183 = vxpose.xlu0.b32.cont [14/16] %v2135, 128
      %2184 = vxpose.xlu0.b32.cont [15/16] %v2136, 128
      %2185 = vxpose.xlu0.b32.end [16/16] %v2137, 128
      %v2186 = vpop.trf.xlu0
      %v2187 = vpop.trf.xlu0
      %v2188 = vpop.trf.xlu0
      %v2189 = vpop.trf.xlu0
      %v2190 = vpop.trf.xlu0
      %v2191 = vpop.trf.xlu0
      %v2192 = vpop.trf.xlu0
      %v2193 = vpop.trf.xlu0
      %v2194 = vpop.trf.xlu0
      %v2195 = vpop.trf.xlu0
      %v2196 = vpop.trf.xlu0
      %v2197 = vpop.trf.xlu0
      %v2198 = vpop.trf.xlu0
      %v2199 = vpop.trf.xlu0
      %v2200 = vpop.trf.xlu0
      %v2201 = vpop.trf.xlu0
      %v2202 = vpack.c.bf16 %v2155, %v2154
      %v2203 = vpack.c.bf16 %v2187, %v2186
      %v2204 = vld [vmem:[%s5] sm:$0xf]
      %v2205 = vld [vmem:[%s5 + $0x4] sm:$0xf]
      %v2206 = vld [vmem:[%s5 + $0x8] sm:$0xf]
      %v2207 = vld [vmem:[%s5 + $0xc] sm:$0xf]
      %v2208 = vld [vmem:[%s5 + $0x10] sm:$0xf]
      %v2209 = vld [vmem:[%s5 + $0x14] sm:$0xf]
      %v2210 = vld [vmem:[%s5 + $0x18] sm:$0xf]
      %v2211 = vld [vmem:[%s5 + $0x1c] sm:$0xf]
      %v2212 = vld [vmem:[%s6] sm:$0xff]
      %v2213 = vld [vmem:[%s6 + $0x8] sm:$0xff]
      %v2214 = vld [vmem:[%s6 + $0x10] sm:$0xff]
      %v2215 = vld [vmem:[%s6 + $0x18] sm:$0xff]
      %v2216 = vld [vmem:[%s6 + $0x20] sm:$0xff]
      %v2217 = vld [vmem:[%s6 + $0x28] sm:$0xff]
      %v2218 = vld [vmem:[%s6 + $0x30] sm:$0xff]
      %v2219 = vld [vmem:[%s6 + $0x38] sm:$0xff]
      %2221 = vset.pattern.permute.xlu0 0
      %2222 = vperm.xlu0 %2221, %v2212
      %v2223 = vpop.permute.xlu0 %2222
      %2226 = vset.pattern.permute.xlu0 0
      %2227 = vperm.xlu0 %2226, %v2213
      %v2228 = vpop.permute.xlu0 %2227
      %2231 = vset.pattern.permute.xlu0 0
      %2232 = vperm.xlu0 %2231, %v2214
      %v2233 = vpop.permute.xlu0 %2232
      %2236 = vset.pattern.permute.xlu0 0
      %2237 = vperm.xlu0 %2236, %v2215
      %v2238 = vpop.permute.xlu0 %2237
      %2241 = vset.pattern.permute.xlu0 0
      %2242 = vperm.xlu0 %2241, %v2216
      %v2243 = vpop.permute.xlu0 %2242
      %2246 = vset.pattern.permute.xlu0 0
      %2247 = vperm.xlu0 %2246, %v2217
      %v2248 = vpop.permute.xlu0 %2247
      %2251 = vset.pattern.permute.xlu0 0
      %2252 = vperm.xlu0 %2251, %v2218
      %v2253 = vpop.permute.xlu0 %2252
      %2256 = vset.pattern.permute.xlu0 0
      %2257 = vperm.xlu0 %2256, %v2219
      %v2258 = vpop.permute.xlu0 %2257
      %v2268 = vunpack.c.l.b16 %v2204
      %v2269 = vunpack.c.l.b16 %v2205
      %v2270 = vunpack.c.l.b16 %v2206
      %v2271 = vunpack.c.l.b16 %v2207
      %v2272 = vunpack.c.l.b16 %v2208
      %v2273 = vunpack.c.l.b16 %v2209
      %v2274 = vunpack.c.l.b16 %v2210
      %v2275 = vunpack.c.l.b16 %v2211
      %v2276 = vpack.c.b16 %v2269, %v2268
      %v2277 = vpack.c.b16 %v2271, %v2270
      %v2278 = vpack.c.b16 %v2273, %v2272
      %v2279 = vpack.c.b16 %v2275, %v2274
      %v2281 = vsel %vm359, %v2276, 0
      %v2284 = vsel %vm359, %v2277, 0
      %v2287 = vsel %vm359, %v2278, 0
      %v2290 = vsel %vm359, %v2279, 0
      %2292 = vmatprep.subr.bf16.mxu0 %v2203
      %2293 = vmatpush1.bf16.msra.mxu0 %v2202
      %2294 = vmatprep.subr.bf16.mxu0 0
      %2295 = vmatpush1.bf16.msra.mxu0 0
      %2296 = vmatprep.subr.bf16.mxu0 0
      %2297 = vmatpush1.bf16.msra.mxu0 0
      %2298 = vmatprep.subr.bf16.mxu0 0
      %2299 = vmatpush1.bf16.msra.mxu0 0
      %2300 = vmatprep.subr.bf16.mxu0 0
      %2301 = vmatpush1.bf16.msra.mxu0 0
      %2302 = vmatprep.subr.bf16.mxu0 0
      %2303 = vmatpush1.bf16.msra.mxu0 0
      %2304 = vmatprep.subr.bf16.mxu0 0
      %2305 = vmatpush1.bf16.msra.mxu0 0
      %2306 = vmatprep.subr.bf16.mxu0 0
      %2307 = vmatpush1.bf16.msra.mxu0 0
      %2308 = vmatprep.subr.bf16.mxu0 0
      %2309 = vmatpush1.bf16.msra.mxu0 0
      %2310 = vmatprep.subr.bf16.mxu0 0
      %2311 = vmatpush1.bf16.msra.mxu0 0
      %2312 = vmatprep.subr.bf16.mxu0 0
      %2313 = vmatpush1.bf16.msra.mxu0 0
      %2314 = vmatprep.subr.bf16.mxu0 0
      %2315 = vmatpush1.bf16.msra.mxu0 0
      %2316 = vmatprep.subr.bf16.mxu0 0
      %2317 = vmatpush1.bf16.msra.mxu0 0
      %2318 = vmatprep.subr.bf16.mxu0 0
      %2319 = vmatpush1.bf16.msra.mxu0 0
      %2320 = vmatprep.subr.bf16.mxu0 0
      %2321 = vmatpush1.bf16.msra.mxu0 0
      %2322 = vmatprep.subr.bf16.mxu0 0
      %2323 = vmatpush1.bf16.msra.mxu0 0
      %2324 = vmatprep.mubr.bf16.mxu0 0
      %2325 = vmatmul.mubr.bf16.gmra.mrb[0].mxu0 %v2281
      %v2326 = vpop.f32.mrb[0].mxu0
      %v2327 = vadd.f32 %v2223, %v2326
      %v2328 = vpop.f32.mrb[0].mxu0
      %v2329 = vadd.f32 %v2223, %v2328
      %v2330 = vpop.f32.mrb[0].mxu0
      %v2331 = vadd.f32 %v2228, %v2330
      %v2332 = vpop.f32.mrb[0].mxu0
      %v2333 = vadd.f32 %v2228, %v2332
      %2334 = vmatprep.mubr.bf16.mxu0 0
      %2335 = vmatmul.mubr.bf16.gmra.mrb[0].mxu0 %v2284
      %v2336 = vpop.f32.mrb[0].mxu0
      %v2337 = vadd.f32 %v2233, %v2336
      %v2338 = vpop.f32.mrb[0].mxu0
      %v2339 = vadd.f32 %v2233, %v2338
      %v2340 = vpop.f32.mrb[0].mxu0
      %v2341 = vadd.f32 %v2238, %v2340
      %v2342 = vpop.f32.mrb[0].mxu0
      %v2343 = vadd.f32 %v2238, %v2342
      %2344 = vmatprep.mubr.bf16.mxu0 0
      %2345 = vmatmul.mubr.bf16.gmra.mrb[0].mxu0 %v2287
      %v2346 = vpop.f32.mrb[0].mxu0
      %v2347 = vadd.f32 %v2243, %v2346
      %v2348 = vpop.f32.mrb[0].mxu0
      %v2349 = vadd.f32 %v2243, %v2348
      %v2350 = vpop.f32.mrb[0].mxu0
      %v2351 = vadd.f32 %v2248, %v2350
      %v2352 = vpop.f32.mrb[0].mxu0
      %v2353 = vadd.f32 %v2248, %v2352
      %2354 = vmatprep.mubr.bf16.mxu0 0
      %2355 = vmatmul.mubr.bf16.gmra.mrb[0].mxu0 %v2290
      %v2356 = vpop.f32.mrb[0].mxu0
      %v2357 = vadd.f32 %v2253, %v2356
      %v2358 = vpop.f32.mrb[0].mxu0
      %v2359 = vadd.f32 %v2253, %v2358
      %v2360 = vpop.f32.mrb[0].mxu0
      %v2361 = vadd.f32 %v2258, %v2360
      %v2362 = vpop.f32.mrb[0].mxu0
      %v2363 = vadd.f32 %v2258, %v2362
      %2364 = vdwg.mxu0
      %v2365 = vld [vmem:[%s7] sm:$0xf]
      %v2366 = vld [vmem:[%s7 + $0x4] sm:$0xf]
      %v2367 = vld [vmem:[%s7 + $0x8] sm:$0xf]
      %v2368 = vld [vmem:[%s7 + $0xc] sm:$0xf]
      %v2369 = vld [vmem:[%s7 + $0x10] sm:$0xf]
      %v2370 = vld [vmem:[%s7 + $0x14] sm:$0xf]
      %v2371 = vld [vmem:[%s7 + $0x18] sm:$0xf]
      %v2372 = vld [vmem:[%s7 + $0x1c] sm:$0xf]
      %v2373 = vld [vmem:[%s8] sm:$0xff]
      %v2374 = vld [vmem:[%s8 + $0x8] sm:$0xff]
      %v2375 = vld [vmem:[%s8 + $0x10] sm:$0xff]
      %v2376 = vld [vmem:[%s8 + $0x18] sm:$0xff]
      %v2377 = vld [vmem:[%s8 + $0x20] sm:$0xff]
      %v2378 = vld [vmem:[%s8 + $0x28] sm:$0xff]
      %v2379 = vld [vmem:[%s8 + $0x30] sm:$0xff]
      %v2380 = vld [vmem:[%s8 + $0x38] sm:$0xff]
      %2382 = vset.pattern.permute.xlu0 0
      %2383 = vperm.xlu0 %2382, %v2373
      %v2384 = vpop.permute.xlu0 %2383
      %2387 = vset.pattern.permute.xlu0 0
      %2388 = vperm.xlu0 %2387, %v2374
      %v2389 = vpop.permute.xlu0 %2388
      %2392 = vset.pattern.permute.xlu0 0
      %2393 = vperm.xlu0 %2392, %v2375
      %v2394 = vpop.permute.xlu0 %2393
      %2397 = vset.pattern.permute.xlu0 0
      %2398 = vperm.xlu0 %2397, %v2376
      %v2399 = vpop.permute.xlu0 %2398
      %2402 = vset.pattern.permute.xlu0 0
      %2403 = vperm.xlu0 %2402, %v2377
      %v2404 = vpop.permute.xlu0 %2403
      %2407 = vset.pattern.permute.xlu0 0
      %2408 = vperm.xlu0 %2407, %v2378
      %v2409 = vpop.permute.xlu0 %2408
      %2412 = vset.pattern.permute.xlu0 0
      %2413 = vperm.xlu0 %2412, %v2379
      %v2414 = vpop.permute.xlu0 %2413
      %2417 = vset.pattern.permute.xlu0 0
      %2418 = vperm.xlu0 %2417, %v2380
      %v2419 = vpop.permute.xlu0 %2418
      %v2429 = vunpack.c.l.b16 %v2365
      %v2430 = vunpack.c.l.b16 %v2366
      %v2431 = vunpack.c.l.b16 %v2367
      %v2432 = vunpack.c.l.b16 %v2368
      %v2433 = vunpack.c.l.b16 %v2369
      %v2434 = vunpack.c.l.b16 %v2370
      %v2435 = vunpack.c.l.b16 %v2371
      %v2436 = vunpack.c.l.b16 %v2372
      %v2437 = vpack.c.b16 %v2430, %v2429
      %v2438 = vpack.c.b16 %v2432, %v2431
      %v2439 = vpack.c.b16 %v2434, %v2433
      %v2440 = vpack.c.b16 %v2436, %v2435
      %v2442 = vsel %vm359, %v2437, 0
      %v2445 = vsel %vm359, %v2438, 0
      %v2448 = vsel %vm359, %v2439, 0
      %v2451 = vsel %vm359, %v2440, 0
      %2453 = vmatprep.subr.bf16.mxu0 %v339
      %2454 = vmatpush1.bf16.msra.mxu0 %v338
      %2455 = vmatprep.subr.bf16.mxu0 0
      %2456 = vmatpush1.bf16.msra.mxu0 0
      %2457 = vmatprep.subr.bf16.mxu0 0
      %2458 = vmatpush1.bf16.msra.mxu0 0
      %2459 = vmatprep.subr.bf16.mxu0 0
      %2460 = vmatpush1.bf16.msra.mxu0 0
      %2461 = vmatprep.subr.bf16.mxu0 0
      %2462 = vmatpush1.bf16.msra.mxu0 0
      %2463 = vmatprep.subr.bf16.mxu0 0
      %2464 = vmatpush1.bf16.msra.mxu0 0
      %2465 = vmatprep.subr.bf16.mxu0 0
      %2466 = vmatpush1.bf16.msra.mxu0 0
      %2467 = vmatprep.subr.bf16.mxu0 0
      %2468 = vmatpush1.bf16.msra.mxu0 0
      %2469 = vmatprep.subr.bf16.mxu0 0
      %2470 = vmatpush1.bf16.msra.mxu0 0
      %2471 = vmatprep.subr.bf16.mxu0 0
      %2472 = vmatpush1.bf16.msra.mxu0 0
      %2473 = vmatprep.subr.bf16.mxu0 0
      %2474 = vmatpush1.bf16.msra.mxu0 0
      %2475 = vmatprep.subr.bf16.mxu0 0
      %2476 = vmatpush1.bf16.msra.mxu0 0
      %2477 = vmatprep.subr.bf16.mxu0 0
      %2478 = vmatpush1.bf16.msra.mxu0 0
      %2479 = vmatprep.subr.bf16.mxu0 0
      %2480 = vmatpush1.bf16.msra.mxu0 0
      %2481 = vmatprep.subr.bf16.mxu0 0
      %2482 = vmatpush1.bf16.msra.mxu0 0
      %2483 = vmatprep.subr.bf16.mxu0 0
      %2484 = vmatpush1.bf16.msra.mxu0 0
      %2485 = vmatprep.mubr.bf16.mxu0 0
      %2486 = vmatmul.mubr.bf16.gmra.mrb[0].mxu0 %v2442
      %v2487 = vpop.f32.mrb[0].mxu0
      %v2488 = vadd.f32 %v2384, %v2487
      %v2489 = vpop.f32.mrb[0].mxu0
      %v2490 = vadd.f32 %v2384, %v2489
      %v2491 = vpop.f32.mrb[0].mxu0
      %v2492 = vadd.f32 %v2389, %v2491
      %v2493 = vpop.f32.mrb[0].mxu0
      %v2494 = vadd.f32 %v2389, %v2493
      %2495 = vmatprep.mubr.bf16.mxu0 0
      %2496 = vmatmul.mubr.bf16.gmra.mrb[0].mxu0 %v2445
      %v2497 = vpop.f32.mrb[0].mxu0
      %v2498 = vadd.f32 %v2394, %v2497
      %v2499 = vpop.f32.mrb[0].mxu0
      %v2500 = vadd.f32 %v2394, %v2499
      %v2501 = vpop.f32.mrb[0].mxu0
      %v2502 = vadd.f32 %v2399, %v2501
      %v2503 = vpop.f32.mrb[0].mxu0
      %v2504 = vadd.f32 %v2399, %v2503
      %2505 = vmatprep.mubr.bf16.mxu0 0
      %2506 = vmatmul.mubr.bf16.gmra.mrb[0].mxu0 %v2448
      %v2507 = vpop.f32.mrb[0].mxu0
      %v2508 = vadd.f32 %v2404, %v2507
      %v2509 = vpop.f32.mrb[0].mxu0
      %v2510 = vadd.f32 %v2404, %v2509
      %v2511 = vpop.f32.mrb[0].mxu0
      %v2512 = vadd.f32 %v2409, %v2511
      %v2513 = vpop.f32.mrb[0].mxu0
      %v2514 = vadd.f32 %v2409, %v2513
      %2515 = vmatprep.mubr.bf16.mxu0 0
      %2516 = vmatmul.mubr.bf16.gmra.mrb[0].mxu0 %v2451
      %v2517 = vpop.f32.mrb[0].mxu0
      %v2518 = vadd.f32 %v2414, %v2517
      %v2519 = vpop.f32.mrb[0].mxu0
      %v2520 = vadd.f32 %v2414, %v2519
      %v2521 = vpop.f32.mrb[0].mxu0
      %v2522 = vadd.f32 %v2419, %v2521
      %v2523 = vpop.f32.mrb[0].mxu0
      %v2524 = vadd.f32 %v2419, %v2523
      %2525 = vdwg.mxu0
      %v2526 = vadd.f32 %v2327, %v2488
      %v2527 = vadd.f32 %v2329, %v2490
      %v2528 = vadd.f32 %v2331, %v2492
      %v2529 = vadd.f32 %v2333, %v2494
      %v2530 = vadd.f32 %v2337, %v2498
      %v2531 = vadd.f32 %v2339, %v2500
      %v2532 = vadd.f32 %v2341, %v2502
      %v2533 = vadd.f32 %v2343, %v2504
      %v2534 = vadd.f32 %v2347, %v2508
      %v2535 = vadd.f32 %v2349, %v2510
      %v2536 = vadd.f32 %v2351, %v2512
      %v2537 = vadd.f32 %v2353, %v2514
      %v2538 = vadd.f32 %v2357, %v2518
      %v2539 = vadd.f32 %v2359, %v2520
      %v2540 = vadd.f32 %v2361, %v2522
      %v2541 = vadd.f32 %v2363, %v2524
      %v2542 = vmax.f32 %v2526, 0.0
      %v2543 = vmax.f32 %v2527, 0.0
      %v2544 = vmax.f32 %v2528, 0.0
      %v2545 = vmax.f32 %v2529, 0.0
      %v2546 = vmax.f32 %v2530, 0.0
      %v2547 = vmax.f32 %v2531, 0.0
      %v2548 = vmax.f32 %v2532, 0.0
      %v2549 = vmax.f32 %v2533, 0.0
      %v2550 = vmax.f32 %v2534, 0.0
      %v2551 = vmax.f32 %v2535, 0.0
      %v2552 = vmax.f32 %v2536, 0.0
      %v2553 = vmax.f32 %v2537, 0.0
      %v2554 = vmax.f32 %v2538, 0.0
      %v2555 = vmax.f32 %v2539, 0.0
      %v2556 = vmax.f32 %v2540, 0.0
      %v2557 = vmax.f32 %v2541, 0.0
      %2558 = vst [vmem:[%s332] sm:$0xff] %v2542
      %2559 = vst [vmem:[%s332 + $0x8] sm:$0xff] %v2543
      %2560 = vst [vmem:[%s332 + $0x10] sm:$0xff] %v2544
      %2561 = vst [vmem:[%s332 + $0x18] sm:$0xff] %v2545
      %2562 = vst [vmem:[%s332 + $0x20] sm:$0xff] %v2546
      %2563 = vst [vmem:[%s332 + $0x28] sm:$0xff] %v2547
      %2564 = vst [vmem:[%s332 + $0x30] sm:$0xff] %v2548
      %2565 = vst [vmem:[%s332 + $0x38] sm:$0xff] %v2549
      %2566 = vst [vmem:[%s332 + $0x40] sm:$0xff] %v2550
      %2567 = vst [vmem:[%s332 + $0x48] sm:$0xff] %v2551
      %2568 = vst [vmem:[%s332 + $0x50] sm:$0xff] %v2552
      %2569 = vst [vmem:[%s332 + $0x58] sm:$0xff] %v2553
      %2570 = vst [vmem:[%s332 + $0x60] sm:$0xff] %v2554
      %2571 = vst [vmem:[%s332 + $0x68] sm:$0xff] %v2555
      %2572 = vst [vmem:[%s332 + $0x70] sm:$0xff] %v2556
      %2573 = vst [vmem:[%s332 + $0x78] sm:$0xff] %v2557
      %p2574 = scmp.lt.s32.totalorder %s20, 1
      %s2575 = scalar_select %p2574, %s20, 1
      %s2576 = smul.addr %s2575, 16
      %s2577 = smul.addr %s2576, 8
      %s2578 = scalar_lea.vmem %s9, %s2577
      // Predicated region
      $region57: #{_lambda_.1} parent=55 // pred_check
        %p2579 = pneg %p232
      $region58: #{_lambda_.1} parent=55 // pred_check_branch
        %2581 = sbr.rel (%p2579) target = $region60
      $region59: #{_lambda_.1} parent=55 // pred_region
        _
      $region60: #{_lambda_.1} parent=55 // pred_fallthru
        _
    $region56: #{_lambda_.1} parent=5 // pred_fallthru
      _
    %p2582 = scmp.le.s32.totalorder 2, %s15
    // Predicated region
    $region61: #{_lambda_.1} parent=5 // pred_check
      %p2583 = pneg %p2582
    $region62: #{_lambda_.1} parent=5 // pred_check_branch
      %2585 = sbr.rel (%p2583) target = $region64
    $region63: #{_lambda_.1} parent=5 // pred_region
      %s2586 = ssub.s32 %s15, 2
      // Predicated region
      $region65: #{_lambda_.1} parent=63 // pred_check
        %p2587 = pneg %p238
      $region66: #{_lambda_.1} parent=63 // pred_check_branch
        %2589 = sbr.rel (%p2587) target = $region68
      $region67: #{_lambda_.1} parent=63 // pred_region
        %p2590 = scmp.lt.s32.totalorder %s21, 1
        %s2591 = scalar_select %p2590, %s21, 1
        %s2592 = smul.addr %s2591, 16
        %s2593 = smul.addr %s2592, 8
        %s2594 = scalar_lea.vmem %s9, %s2593
      $region68: #{_lambda_.1} parent=63 // pred_fallthru
        _
    $region64: #{_lambda_.1} parent=5 // pred_fallthru
      _
  $region6: #{_lambda_.1} parent=0 // loop_footer
    %s19 = sadd.s32 1, %s15
  $region7: #{_lambda_.1} parent=0 // loop_footer_branch
    %14 = sbr.rel target = $region3
  $region8: #{_lambda_.1} parent=0 // loop_exit
    _

</llo_original>
